<compile_context>
chip_gen: v6e
topology: v6e:2x2x1
jax: 0.10.0
libtpu: 0.0.40
codegen_flags: <defaults>
</compile_context>

<pallas_src>
import functools

import jax
import jax.numpy as jnp
from jax.experimental import pallas as pl
from jax.experimental.pallas import tpu as pltpu


def gcn_kernel(x_ref, avt_ref, abdt_ref, wbd_ref, b_ref, o_ref, *,
               support_len, order, n_nodes):
    """One block of NB batch elements per grid step.

    x_ref   : (1, V, NB*L*C)          x_ref[0][v, nb*L*C + l*C + c] == x[n,c,v,l]
    avt_ref : (S*V, V)                vertically stacked A_s^T          (resident)
    abdt_ref: (S*V, S*V)              blockdiag(A_1^T, ..., A_S^T)      (resident)
    wbd_ref : (G, NB*L*C, NB*L*c_out) bf16 block-diagonal 1x1-conv wts  (resident)
    b_ref   : (1, NB*L*c_out)         bias tiled along the lane dim     (resident)
    o_ref   : (1, V, NB*L*c_out)      o_ref[0][v, nb*L*c_out + l*c_out + o]
    """
    V, S = n_nodes, support_len

    x0 = x_ref[0].astype(jnp.float32)                     # (V, NB*L*C)

    def conv_contrib(group, feat_f32):
        # 1x1 conv of one hop group, done in the (V, NB*L*C) layout via the
        # block-diagonal weight: (V, F_in) @ (F_in, F_out) bf16 MXU matmul,
        # f32 accumulation. No transpose / relayout needed.
        return jnp.dot(feat_f32.astype(jnp.bfloat16), wbd_ref[group],
                       preferred_element_type=jnp.float32)

    y = conv_contrib(0, x0)                               # group 0 = x itself

    # Block-diagonalized graph propagation (f32 hops for accuracy).
    hop = jnp.dot(avt_ref[...], x0, preferred_element_type=jnp.float32)
    for j in range(1, order + 1):
        if j > 1:
            hop = jnp.dot(abdt_ref[...], hop, preferred_element_type=jnp.float32)
        for s in range(S):
            g = 1 + s * order + (j - 1)                   # PyTorch concat order
            y = y + conv_contrib(g, hop[s * V:(s + 1) * V, :])

    y = y + b_ref[...].astype(jnp.float32)                # bias, broadcast over V
    # dropout(training=False) == identity
    o_ref[0] = y.astype(o_ref.dtype)


def _pick_batch_block(n_batch, lanes_per_batch):
    """Smallest divisor of n_batch whose folded lane width reaches 128."""
    for cand in range(1, n_batch + 1):
        if n_batch % cand == 0 and cand * lanes_per_batch >= 128:
            return cand
    return n_batch


def gcn_forward(x_nchw, supports, conv_weight, conv_bias, *, order=2):
    """x_nchw: (N, C, V, L); supports: list of (V, V); conv_weight: (c_out, K, 1, 1)."""
    N, C, V, L = x_nchw.shape
    S = len(supports)
    c_out = conv_weight.shape[0]
    G = order * S + 1
    K = conv_weight.shape[1]
    assert K == G * C

    nb = _pick_batch_block(N, L * c_out)   # batch elements folded into lanes
    n_grid = N // nb
    f_in = nb * L * C
    f_out = nb * L * c_out

    # kernel input layout (n_grid, V, NB*L*C): lane index = nb*L*C + l*C + c
    x_k = (x_nchw.reshape(n_grid, nb, C, V, L)
           .transpose(0, 3, 1, 4, 2)
           .reshape(n_grid, V, f_in))

    # stacked / block-diagonal pre-transposed supports (f32, resident)
    avt = jnp.concatenate([a.T for a in supports], axis=0).astype(jnp.float32)
    abdt = jnp.zeros((S * V, S * V), jnp.float32)
    for s, a in enumerate(supports):
        abdt = abdt.at[s * V:(s + 1) * V, s * V:(s + 1) * V].set(a.T)

    # block-diagonal 1x1-conv weight: wbd[g] = kron(I_{NB*L}, W_g^T), bf16
    w_g = conv_weight.reshape(c_out, G, C).astype(jnp.float32)   # [o, g, c]
    eye = jnp.eye(nb * L, dtype=jnp.float32)
    wbd = (jnp.einsum('pq,ogc->gpcqo', eye, w_g)
           .reshape(G, f_in, f_out).astype(jnp.bfloat16))

    bias_lane = jnp.tile(conv_bias.astype(jnp.float32), nb * L).reshape(1, f_out)

    kernel = functools.partial(gcn_kernel, support_len=S, order=order, n_nodes=V)

    def build(single_buffer_resident):
        res_kw = ({"pipeline_mode": pl.Buffered(1)} if single_buffer_resident
                  else {})
        return pl.pallas_call(
            kernel,
            out_shape=jax.ShapeDtypeStruct((n_grid, V, f_out), x_nchw.dtype),
            grid=(n_grid,),
            in_specs=[
                pl.BlockSpec((1, V, f_in), lambda n: (n, 0, 0)),
                pl.BlockSpec((S * V, V), lambda n: (0, 0), **res_kw),
                pl.BlockSpec((S * V, S * V), lambda n: (0, 0), **res_kw),
                pl.BlockSpec((G, f_in, f_out), lambda n: (0, 0, 0), **res_kw),
                pl.BlockSpec((1, f_out), lambda n: (0, 0), **res_kw),
            ],
            out_specs=pl.BlockSpec((1, V, f_out), lambda n: (n, 0, 0)),
            compiler_params=pltpu.CompilerParams(
                dimension_semantics=("parallel",)),
        )

    try:
        out = build(True)(x_k, avt, abdt, wbd, bias_lane)
    except Exception:
        # Fallback if pipeline_mode=pl.Buffered(1) is unsupported on this jax
        # version; resident blocks are tiny here so default double-buffering
        # is harmless.
        out = build(False)(x_k, avt, abdt, wbd, bias_lane)

    # (n_grid, V, NB*L*c_out) -> (N, c_out, V, L): wrapper-side layout plumbing.
    return (out.reshape(n_grid, V, nb, L, c_out)
            .transpose(0, 2, 4, 1, 3)
            .reshape(N, c_out, V, L))


def gcn_reference(x, supports, conv_weight, conv_bias, *, order=2):
    """Pure-JAX reference mirroring the PyTorch module (NCHW)."""
    out = [x]
    for a in supports:
        x1 = jnp.einsum('ncvl,vw->ncwl', x, a)
        out.append(x1)
        for _ in range(2, order + 1):
            x2 = jnp.einsum('ncvl,vw->ncwl', x1, a)
            out.append(x2)
            x1 = x2
    h = jnp.concatenate(out, axis=1)
    w2 = conv_weight.reshape(conv_weight.shape[0], conv_weight.shape[1])
    y = jnp.einsum('oc,ncvl->novl', w2, h) + conv_bias[None, :, None, None]
    return y  # dropout(training=False) == identity


if __name__ == "__main__":
    # small shapes: batch=2, channels=4, nodes=8, seq_len=8, c_out=8,
    # support_len=3, order=2  ->  K = (2*3+1)*4 = 28
    N, C, V, L = 2, 4, 8, 8
    SUPPORT_LEN, ORDER = 3, 2
    C_OUT = 8
    K = (ORDER * SUPPORT_LEN + 1) * C

    key = jax.random.PRNGKey(0)
    kx, ka, kw, kb = jax.random.split(key, 4)

    x = jax.random.normal(kx, (N, C, V, L), dtype=jnp.float32)
    support_keys = jax.random.split(ka, SUPPORT_LEN)
    supports = [jax.random.uniform(k, (V, V), dtype=jnp.float32)
                for k in support_keys]
    conv_weight = 0.1 * jax.random.normal(kw, (C_OUT, K, 1, 1), dtype=jnp.float32)
    conv_bias = 0.1 * jax.random.normal(kb, (C_OUT,), dtype=jnp.float32)

    y = gcn_forward(x, supports, conv_weight, conv_bias, order=ORDER)
    y = jax.block_until_ready(y)

    y_ref = gcn_reference(x, supports, conv_weight, conv_bias, order=ORDER)
    assert y.shape == (N, C_OUT, V, L)
    # bf16 MXU feed on the 1x1-conv matmul -> compare at a looser tolerance
    assert jnp.allclose(y, y_ref, rtol=5e-2, atol=5e-2), "mismatch vs reference"

    print("KERNEL_OK")
</pallas_src>

<mosaic_0001>
module attributes {stable_mosaic.version = 11 : i64} {
  func.func @gcn_kernel(%arg0: i32, %arg1: memref<1x8x64xf32, #tpu.memory_space<vmem>>, %arg2: memref<24x8xf32, #tpu.memory_space<vmem>>, %arg3: memref<24x24xf32, #tpu.memory_space<vmem>>, %arg4: memref<7x64x128xbf16, #tpu.memory_space<vmem>>, %arg5: memref<1x128xf32, #tpu.memory_space<vmem>>, %arg6: memref<1x8x128xf32, #tpu.memory_space<vmem>>) attributes {dimension_semantics = [#tpu.dimension_semantics<parallel>], iteration_bounds = array<i64: 1>, scalar_prefetch = 0 : i64, scratch_operands = 0 : i64, tpu.core_type = #tpu.core_type<tc>, window_params = [{transform_indices = @transform_0, window_bounds = array<i64: 1, 8, 64>}, {pipeline_mode = #tpu.pipeline_mode<synchronous>, transform_indices = @transform_1, window_bounds = array<i64: 24, 8>}, {pipeline_mode = #tpu.pipeline_mode<synchronous>, transform_indices = @transform_2, window_bounds = array<i64: 24, 24>}, {pipeline_mode = #tpu.pipeline_mode<synchronous>, transform_indices = @transform_3, window_bounds = array<i64: 7, 64, 128>}, {pipeline_mode = #tpu.pipeline_mode<synchronous>, transform_indices = @transform_4, window_bounds = array<i64: 1, 128>}, {transform_indices = @transform_5, window_bounds = array<i64: 1, 8, 128>}]} {
    %c0 = arith.constant 0 : index
    %c0_0 = arith.constant 0 : index
    %c0_1 = arith.constant 0 : index
    %0 = vector.load %arg1[%c0, %c0_0, %c0_1] : memref<1x8x64xf32, #tpu.memory_space<vmem>>, vector<1x8x64xf32>
    %1 = vector.shape_cast %0 : vector<1x8x64xf32> to vector<8x64xf32>
    %2 = arith.truncf %1 : vector<8x64xf32> to vector<8x64xbf16>
    %c0_2 = arith.constant 0 : index
    %c0_3 = arith.constant 0 : index
    %c0_4 = arith.constant 0 : index
    %3 = vector.load %arg4[%c0_2, %c0_3, %c0_4] : memref<7x64x128xbf16, #tpu.memory_space<vmem>>, vector<1x64x128xbf16>
    %4 = vector.shape_cast %3 : vector<1x64x128xbf16> to vector<64x128xbf16>
    %cst = arith.constant dense<0.000000e+00> : vector<8x128xf32>
    %5 = tpu.matmul %2, %4, %cst {dimension_numbers = #tpu.dot_dimension_numbers<[1], [0], [0], [1], [0, 0, 1, 1], [], []>} : vector<8x64xbf16>, vector<64x128xbf16>, vector<8x128xf32> -> vector<8x128xf32>
    %c0_5 = arith.constant 0 : index
    %c0_6 = arith.constant 0 : index
    %6 = vector.load %arg2[%c0_5, %c0_6] : memref<24x8xf32, #tpu.memory_space<vmem>>, vector<24x8xf32>
    %cst_7 = arith.constant dense<0.000000e+00> : vector<24x64xf32>
    %7 = tpu.matmul %6, %1, %cst_7 {dimension_numbers = #tpu.dot_dimension_numbers<[1], [0], [0], [1], [0, 0, 1, 1], [], []>} : vector<24x8xf32>, vector<8x64xf32>, vector<24x64xf32> -> vector<24x64xf32>
    %8 = vector.extract_strided_slice %7 {offsets = [0, 0], sizes = [8, 64], strides = [1, 1]} : vector<24x64xf32> to vector<8x64xf32>
    %9 = arith.truncf %8 : vector<8x64xf32> to vector<8x64xbf16>
    %c1 = arith.constant 1 : index
    %c0_8 = arith.constant 0 : index
    %c0_9 = arith.constant 0 : index
    %10 = vector.load %arg4[%c1, %c0_8, %c0_9] : memref<7x64x128xbf16, #tpu.memory_space<vmem>>, vector<1x64x128xbf16>
    %11 = vector.shape_cast %10 : vector<1x64x128xbf16> to vector<64x128xbf16>
    %cst_10 = arith.constant dense<0.000000e+00> : vector<8x128xf32>
    %12 = tpu.matmul %9, %11, %cst_10 {dimension_numbers = #tpu.dot_dimension_numbers<[1], [0], [0], [1], [0, 0, 1, 1], [], []>} : vector<8x64xbf16>, vector<64x128xbf16>, vector<8x128xf32> -> vector<8x128xf32>
    %13 = arith.addf %5, %12 : vector<8x128xf32>
    %14 = vector.extract_strided_slice %7 {offsets = [8, 0], sizes = [8, 64], strides = [1, 1]} : vector<24x64xf32> to vector<8x64xf32>
    %15 = arith.truncf %14 : vector<8x64xf32> to vector<8x64xbf16>
    %c3 = arith.constant 3 : index
    %c0_11 = arith.constant 0 : index
    %c0_12 = arith.constant 0 : index
    %16 = vector.load %arg4[%c3, %c0_11, %c0_12] : memref<7x64x128xbf16, #tpu.memory_space<vmem>>, vector<1x64x128xbf16>
    %17 = vector.shape_cast %16 : vector<1x64x128xbf16> to vector<64x128xbf16>
    %cst_13 = arith.constant dense<0.000000e+00> : vector<8x128xf32>
    %18 = tpu.matmul %15, %17, %cst_13 {dimension_numbers = #tpu.dot_dimension_numbers<[1], [0], [0], [1], [0, 0, 1, 1], [], []>} : vector<8x64xbf16>, vector<64x128xbf16>, vector<8x128xf32> -> vector<8x128xf32>
    %19 = arith.addf %13, %18 : vector<8x128xf32>
    %20 = vector.extract_strided_slice %7 {offsets = [16, 0], sizes = [8, 64], strides = [1, 1]} : vector<24x64xf32> to vector<8x64xf32>
    %21 = arith.truncf %20 : vector<8x64xf32> to vector<8x64xbf16>
    %c5 = arith.constant 5 : index
    %c0_14 = arith.constant 0 : index
    %c0_15 = arith.constant 0 : index
    %22 = vector.load %arg4[%c5, %c0_14, %c0_15] : memref<7x64x128xbf16, #tpu.memory_space<vmem>>, vector<1x64x128xbf16>
    %23 = vector.shape_cast %22 : vector<1x64x128xbf16> to vector<64x128xbf16>
    %cst_16 = arith.constant dense<0.000000e+00> : vector<8x128xf32>
    %24 = tpu.matmul %21, %23, %cst_16 {dimension_numbers = #tpu.dot_dimension_numbers<[1], [0], [0], [1], [0, 0, 1, 1], [], []>} : vector<8x64xbf16>, vector<64x128xbf16>, vector<8x128xf32> -> vector<8x128xf32>
    %25 = arith.addf %19, %24 : vector<8x128xf32>
    %c0_17 = arith.constant 0 : index
    %c0_18 = arith.constant 0 : index
    %26 = vector.load %arg3[%c0_17, %c0_18] : memref<24x24xf32, #tpu.memory_space<vmem>>, vector<24x24xf32>
    %cst_19 = arith.constant dense<0.000000e+00> : vector<24x64xf32>
    %27 = tpu.matmul %26, %7, %cst_19 {dimension_numbers = #tpu.dot_dimension_numbers<[1], [0], [0], [1], [0, 0, 1, 1], [], []>} : vector<24x24xf32>, vector<24x64xf32>, vector<24x64xf32> -> vector<24x64xf32>
    %28 = vector.extract_strided_slice %27 {offsets = [0, 0], sizes = [8, 64], strides = [1, 1]} : vector<24x64xf32> to vector<8x64xf32>
    %29 = arith.truncf %28 : vector<8x64xf32> to vector<8x64xbf16>
    %c2 = arith.constant 2 : index
    %c0_20 = arith.constant 0 : index
    %c0_21 = arith.constant 0 : index
    %30 = vector.load %arg4[%c2, %c0_20, %c0_21] : memref<7x64x128xbf16, #tpu.memory_space<vmem>>, vector<1x64x128xbf16>
    %31 = vector.shape_cast %30 : vector<1x64x128xbf16> to vector<64x128xbf16>
    %cst_22 = arith.constant dense<0.000000e+00> : vector<8x128xf32>
    %32 = tpu.matmul %29, %31, %cst_22 {dimension_numbers = #tpu.dot_dimension_numbers<[1], [0], [0], [1], [0, 0, 1, 1], [], []>} : vector<8x64xbf16>, vector<64x128xbf16>, vector<8x128xf32> -> vector<8x128xf32>
    %33 = arith.addf %25, %32 : vector<8x128xf32>
    %34 = vector.extract_strided_slice %27 {offsets = [8, 0], sizes = [8, 64], strides = [1, 1]} : vector<24x64xf32> to vector<8x64xf32>
    %35 = arith.truncf %34 : vector<8x64xf32> to vector<8x64xbf16>
    %c4 = arith.constant 4 : index
    %c0_23 = arith.constant 0 : index
    %c0_24 = arith.constant 0 : index
    %36 = vector.load %arg4[%c4, %c0_23, %c0_24] : memref<7x64x128xbf16, #tpu.memory_space<vmem>>, vector<1x64x128xbf16>
    %37 = vector.shape_cast %36 : vector<1x64x128xbf16> to vector<64x128xbf16>
    %cst_25 = arith.constant dense<0.000000e+00> : vector<8x128xf32>
    %38 = tpu.matmul %35, %37, %cst_25 {dimension_numbers = #tpu.dot_dimension_numbers<[1], [0], [0], [1], [0, 0, 1, 1], [], []>} : vector<8x64xbf16>, vector<64x128xbf16>, vector<8x128xf32> -> vector<8x128xf32>
    %39 = arith.addf %33, %38 : vector<8x128xf32>
    %40 = vector.extract_strided_slice %27 {offsets = [16, 0], sizes = [8, 64], strides = [1, 1]} : vector<24x64xf32> to vector<8x64xf32>
    %41 = arith.truncf %40 : vector<8x64xf32> to vector<8x64xbf16>
    %c6 = arith.constant 6 : index
    %c0_26 = arith.constant 0 : index
    %c0_27 = arith.constant 0 : index
    %42 = vector.load %arg4[%c6, %c0_26, %c0_27] : memref<7x64x128xbf16, #tpu.memory_space<vmem>>, vector<1x64x128xbf16>
    %43 = vector.shape_cast %42 : vector<1x64x128xbf16> to vector<64x128xbf16>
    %cst_28 = arith.constant dense<0.000000e+00> : vector<8x128xf32>
    %44 = tpu.matmul %41, %43, %cst_28 {dimension_numbers = #tpu.dot_dimension_numbers<[1], [0], [0], [1], [0, 0, 1, 1], [], []>} : vector<8x64xbf16>, vector<64x128xbf16>, vector<8x128xf32> -> vector<8x128xf32>
    %45 = arith.addf %39, %44 : vector<8x128xf32>
    %c0_29 = arith.constant 0 : index
    %c0_30 = arith.constant 0 : index
    %46 = vector.load %arg5[%c0_29, %c0_30] : memref<1x128xf32, #tpu.memory_space<vmem>>, vector<1x128xf32>
    %47 = vector.broadcast %46 : vector<1x128xf32> to vector<8x128xf32>
    %48 = arith.addf %45, %47 : vector<8x128xf32>
    %c0_31 = arith.constant 0 : index
    %c0_32 = arith.constant 0 : index
    %c0_33 = arith.constant 0 : index
    %49 = vector.load %arg6[%c0_31, %c0_32, %c0_33] : memref<1x8x128xf32, #tpu.memory_space<vmem>>, vector<1x8x128xf32>
    %50 = vector.shape_cast %49 : vector<1x8x128xf32> to vector<8x128xf32>
    %51 = vector.shape_cast %48 : vector<8x128xf32> to vector<1x8x128xf32>
    tpu.vector_store %arg6[%c0_31, %c0_32, %c0_33], %51 {strides = array<i32>} : memref<1x8x128xf32, #tpu.memory_space<vmem>>, vector<1x8x128xf32>,
    return
  }
  func.func @transform_0(%arg0: i32) -> (i32, i32, i32) {
    %c0_i32 = arith.constant 0 : i32
    %c0_i32_0 = arith.constant 0 : i32
    %c0_i32_1 = arith.constant 0 : i32
    return %arg0, %c0_i32, %c0_i32_0 : i32, i32, i32
  }
  func.func @transform_1(%arg0: i32) -> (i32, i32) {
    %c0_i32 = arith.constant 0 : i32
    %c0_i32_0 = arith.constant 0 : i32
    %c0_i32_1 = arith.constant 0 : i32
    return %c0_i32, %c0_i32_0 : i32, i32
  }
  func.func @transform_2(%arg0: i32) -> (i32, i32) {
    %c0_i32 = arith.constant 0 : i32
    %c0_i32_0 = arith.constant 0 : i32
    %c0_i32_1 = arith.constant 0 : i32
    return %c0_i32, %c0_i32_0 : i32, i32
  }
  func.func @transform_3(%arg0: i32) -> (i32, i32, i32) {
    %c0_i32 = arith.constant 0 : i32
    %c0_i32_0 = arith.constant 0 : i32
    %c0_i32_1 = arith.constant 0 : i32
    %c0_i32_2 = arith.constant 0 : i32
    return %c0_i32, %c0_i32_0, %c0_i32_1 : i32, i32, i32
  }
  func.func @transform_4(%arg0: i32) -> (i32, i32) {
    %c0_i32 = arith.constant 0 : i32
    %c0_i32_0 = arith.constant 0 : i32
    %c0_i32_1 = arith.constant 0 : i32
    return %c0_i32, %c0_i32_0 : i32, i32
  }
  func.func @transform_5(%arg0: i32) -> (i32, i32, i32) {
    %c0_i32 = arith.constant 0 : i32
    %c0_i32_0 = arith.constant 0 : i32
    %c0_i32_1 = arith.constant 0 : i32
    return %arg0, %c0_i32, %c0_i32_0 : i32, i32, i32
  }
}

module attributes {stable_mosaic.version = 11 : i64} {
  func.func @gcn_kernel(%arg0: i32, %arg1: memref<1x8x64xf32, #tpu.memory_space<vmem>>, %arg2: memref<24x8xf32, #tpu.memory_space<vmem>>, %arg3: memref<24x24xf32, #tpu.memory_space<vmem>>, %arg4: memref<7x64x128xbf16, #tpu.memory_space<vmem>>, %arg5: memref<1x128xf32, #tpu.memory_space<vmem>>, %arg6: memref<1x8x128xf32, #tpu.memory_space<vmem>>) attributes {dimension_semantics = [#tpu.dimension_semantics<parallel>], iteration_bounds = array<i64: 1>, scalar_prefetch = 0 : i64, scratch_operands = 0 : i64, tpu.core_type = #tpu.core_type<tc>, window_params = [{transform_indices = @transform_0, window_bounds = array<i64: 1, 8, 64>}, {pipeline_mode = #tpu.pipeline_mode<synchronous>, transform_indices = @transform_1, window_bounds = array<i64: 24, 8>}, {pipeline_mode = #tpu.pipeline_mode<synchronous>, transform_indices = @transform_2, window_bounds = array<i64: 24, 24>}, {pipeline_mode = #tpu.pipeline_mode<synchronous>, transform_indices = @transform_3, window_bounds = array<i64: 7, 64, 128>}, {pipeline_mode = #tpu.pipeline_mode<synchronous>, transform_indices = @transform_4, window_bounds = array<i64: 1, 128>}, {transform_indices = @transform_5, window_bounds = array<i64: 1, 8, 128>}]} {
    %c0 = arith.constant 0 : index
    %c0_0 = arith.constant 0 : index
    %c0_1 = arith.constant 0 : index
    %0 = vector.load %arg1[%c0, %c0_0, %c0_1] : memref<1x8x64xf32, #tpu.memory_space<vmem>>, vector<1x8x64xf32>
    %1 = vector.shape_cast %0 : vector<1x8x64xf32> to vector<8x64xf32>
    %2 = arith.truncf %1 : vector<8x64xf32> to vector<8x64xbf16>
    %c0_2 = arith.constant 0 : index
    %c0_3 = arith.constant 0 : index
    %c0_4 = arith.constant 0 : index
    %3 = vector.load %arg4[%c0_2, %c0_3, %c0_4] : memref<7x64x128xbf16, #tpu.memory_space<vmem>>, vector<1x64x128xbf16>
    %4 = vector.shape_cast %3 : vector<1x64x128xbf16> to vector<64x128xbf16>
    %cst = arith.constant dense<0.000000e+00> : vector<8x128xf32>
    %5 = tpu.matmul %2, %4, %cst {dimension_numbers = #tpu.dot_dimension_numbers<[1], [0], [0], [1], [0, 0, 1, 1], [], []>} : vector<8x64xbf16>, vector<64x128xbf16>, vector<8x128xf32> -> vector<8x128xf32>
    %c0_5 = arith.constant 0 : index
    %c0_6 = arith.constant 0 : index
    %6 = vector.load %arg2[%c0_5, %c0_6] : memref<24x8xf32, #tpu.memory_space<vmem>>, vector<24x8xf32>
    %cst_7 = arith.constant dense<0.000000e+00> : vector<24x64xf32>
    %7 = tpu.matmul %6, %1, %cst_7 {dimension_numbers = #tpu.dot_dimension_numbers<[1], [0], [0], [1], [0, 0, 1, 1], [], []>} : vector<24x8xf32>, vector<8x64xf32>, vector<24x64xf32> -> vector<24x64xf32>
    %8 = vector.extract_strided_slice %7 {offsets = [0, 0], sizes = [8, 64], strides = [1, 1]} : vector<24x64xf32> to vector<8x64xf32>
    %9 = arith.truncf %8 : vector<8x64xf32> to vector<8x64xbf16>
    %c1 = arith.constant 1 : index
    %c0_8 = arith.constant 0 : index
    %c0_9 = arith.constant 0 : index
    %10 = vector.load %arg4[%c1, %c0_8, %c0_9] : memref<7x64x128xbf16, #tpu.memory_space<vmem>>, vector<1x64x128xbf16>
    %11 = vector.shape_cast %10 : vector<1x64x128xbf16> to vector<64x128xbf16>
    %cst_10 = arith.constant dense<0.000000e+00> : vector<8x128xf32>
    %12 = tpu.matmul %9, %11, %cst_10 {dimension_numbers = #tpu.dot_dimension_numbers<[1], [0], [0], [1], [0, 0, 1, 1], [], []>} : vector<8x64xbf16>, vector<64x128xbf16>, vector<8x128xf32> -> vector<8x128xf32>
    %13 = arith.addf %5, %12 : vector<8x128xf32>
    %14 = vector.extract_strided_slice %7 {offsets = [8, 0], sizes = [8, 64], strides = [1, 1]} : vector<24x64xf32> to vector<8x64xf32>
    %15 = arith.truncf %14 : vector<8x64xf32> to vector<8x64xbf16>
    %c3 = arith.constant 3 : index
    %c0_11 = arith.constant 0 : index
    %c0_12 = arith.constant 0 : index
    %16 = vector.load %arg4[%c3, %c0_11, %c0_12] : memref<7x64x128xbf16, #tpu.memory_space<vmem>>, vector<1x64x128xbf16>
    %17 = vector.shape_cast %16 : vector<1x64x128xbf16> to vector<64x128xbf16>
    %cst_13 = arith.constant dense<0.000000e+00> : vector<8x128xf32>
    %18 = tpu.matmul %15, %17, %cst_13 {dimension_numbers = #tpu.dot_dimension_numbers<[1], [0], [0], [1], [0, 0, 1, 1], [], []>} : vector<8x64xbf16>, vector<64x128xbf16>, vector<8x128xf32> -> vector<8x128xf32>
    %19 = arith.addf %13, %18 : vector<8x128xf32>
    %20 = vector.extract_strided_slice %7 {offsets = [16, 0], sizes = [8, 64], strides = [1, 1]} : vector<24x64xf32> to vector<8x64xf32>
    %21 = arith.truncf %20 : vector<8x64xf32> to vector<8x64xbf16>
    %c5 = arith.constant 5 : index
    %c0_14 = arith.constant 0 : index
    %c0_15 = arith.constant 0 : index
    %22 = vector.load %arg4[%c5, %c0_14, %c0_15] : memref<7x64x128xbf16, #tpu.memory_space<vmem>>, vector<1x64x128xbf16>
    %23 = vector.shape_cast %22 : vector<1x64x128xbf16> to vector<64x128xbf16>
    %cst_16 = arith.constant dense<0.000000e+00> : vector<8x128xf32>
    %24 = tpu.matmul %21, %23, %cst_16 {dimension_numbers = #tpu.dot_dimension_numbers<[1], [0], [0], [1], [0, 0, 1, 1], [], []>} : vector<8x64xbf16>, vector<64x128xbf16>, vector<8x128xf32> -> vector<8x128xf32>
    %25 = arith.addf %19, %24 : vector<8x128xf32>
    %c0_17 = arith.constant 0 : index
    %c0_18 = arith.constant 0 : index
    %26 = vector.load %arg3[%c0_17, %c0_18] : memref<24x24xf32, #tpu.memory_space<vmem>>, vector<24x24xf32>
    %cst_19 = arith.constant dense<0.000000e+00> : vector<24x64xf32>
    %27 = tpu.matmul %26, %7, %cst_19 {dimension_numbers = #tpu.dot_dimension_numbers<[1], [0], [0], [1], [0, 0, 1, 1], [], []>} : vector<24x24xf32>, vector<24x64xf32>, vector<24x64xf32> -> vector<24x64xf32>
    %28 = vector.extract_strided_slice %27 {offsets = [0, 0], sizes = [8, 64], strides = [1, 1]} : vector<24x64xf32> to vector<8x64xf32>
    %29 = arith.truncf %28 : vector<8x64xf32> to vector<8x64xbf16>
    %c2 = arith.constant 2 : index
    %c0_20 = arith.constant 0 : index
    %c0_21 = arith.constant 0 : index
    %30 = vector.load %arg4[%c2, %c0_20, %c0_21] : memref<7x64x128xbf16, #tpu.memory_space<vmem>>, vector<1x64x128xbf16>
    %31 = vector.shape_cast %30 : vector<1x64x128xbf16> to vector<64x128xbf16>
    %cst_22 = arith.constant dense<0.000000e+00> : vector<8x128xf32>
    %32 = tpu.matmul %29, %31, %cst_22 {dimension_numbers = #tpu.dot_dimension_numbers<[1], [0], [0], [1], [0, 0, 1, 1], [], []>} : vector<8x64xbf16>, vector<64x128xbf16>, vector<8x128xf32> -> vector<8x128xf32>
    %33 = arith.addf %25, %32 : vector<8x128xf32>
    %34 = vector.extract_strided_slice %27 {offsets = [8, 0], sizes = [8, 64], strides = [1, 1]} : vector<24x64xf32> to vector<8x64xf32>
    %35 = arith.truncf %34 : vector<8x64xf32> to vector<8x64xbf16>
    %c4 = arith.constant 4 : index
    %c0_23 = arith.constant 0 : index
    %c0_24 = arith.constant 0 : index
    %36 = vector.load %arg4[%c4, %c0_23, %c0_24] : memref<7x64x128xbf16, #tpu.memory_space<vmem>>, vector<1x64x128xbf16>
    %37 = vector.shape_cast %36 : vector<1x64x128xbf16> to vector<64x128xbf16>
    %cst_25 = arith.constant dense<0.000000e+00> : vector<8x128xf32>
    %38 = tpu.matmul %35, %37, %cst_25 {dimension_numbers = #tpu.dot_dimension_numbers<[1], [0], [0], [1], [0, 0, 1, 1], [], []>} : vector<8x64xbf16>, vector<64x128xbf16>, vector<8x128xf32> -> vector<8x128xf32>
    %39 = arith.addf %33, %38 : vector<8x128xf32>
    %40 = vector.extract_strided_slice %27 {offsets = [16, 0], sizes = [8, 64], strides = [1, 1]} : vector<24x64xf32> to vector<8x64xf32>
    %41 = arith.truncf %40 : vector<8x64xf32> to vector<8x64xbf16>
    %c6 = arith.constant 6 : index
    %c0_26 = arith.constant 0 : index
    %c0_27 = arith.constant 0 : index
    %42 = vector.load %arg4[%c6, %c0_26, %c0_27] : memref<7x64x128xbf16, #tpu.memory_space<vmem>>, vector<1x64x128xbf16>
    %43 = vector.shape_cast %42 : vector<1x64x128xbf16> to vector<64x128xbf16>
    %cst_28 = arith.constant dense<0.000000e+00> : vector<8x128xf32>
    %44 = tpu.matmul %41, %43, %cst_28 {dimension_numbers = #tpu.dot_dimension_numbers<[1], [0], [0], [1], [0, 0, 1, 1], [], []>} : vector<8x64xbf16>, vector<64x128xbf16>, vector<8x128xf32> -> vector<8x128xf32>
    %45 = arith.addf %39, %44 : vector<8x128xf32>
    %c0_29 = arith.constant 0 : index
    %c0_30 = arith.constant 0 : index
    %46 = vector.load %arg5[%c0_29, %c0_30] : memref<1x128xf32, #tpu.memory_space<vmem>>, vector<1x128xf32>
    %47 = vector.broadcast %46 : vector<1x128xf32> to vector<8x128xf32>
    %48 = arith.addf %45, %47 : vector<8x128xf32>
    %c0_31 = arith.constant 0 : index
    %c0_32 = arith.constant 0 : index
    %c0_33 = arith.constant 0 : index
    %49 = vector.load %arg6[%c0_31, %c0_32, %c0_33] : memref<1x8x128xf32, #tpu.memory_space<vmem>>, vector<1x8x128xf32>
    %50 = vector.shape_cast %49 : vector<1x8x128xf32> to vector<8x128xf32>
    %51 = vector.shape_cast %48 : vector<8x128xf32> to vector<1x8x128xf32>
    tpu.vector_store %arg6[%c0_31, %c0_32, %c0_33], %51 {strides = array<i32>} : memref<1x8x128xf32, #tpu.memory_space<vmem>>, vector<1x8x128xf32>,
    return
  }
  func.func @transform_0(%arg0: i32) -> (i32, i32, i32) {
    %c0_i32 = arith.constant 0 : i32
    %c0_i32_0 = arith.constant 0 : i32
    %c0_i32_1 = arith.constant 0 : i32
    return %arg0, %c0_i32, %c0_i32_0 : i32, i32, i32
  }
  func.func @transform_1(%arg0: i32) -> (i32, i32) {
    %c0_i32 = arith.constant 0 : i32
    %c0_i32_0 = arith.constant 0 : i32
    %c0_i32_1 = arith.constant 0 : i32
    return %c0_i32, %c0_i32_0 : i32, i32
  }
  func.func @transform_2(%arg0: i32) -> (i32, i32) {
    %c0_i32 = arith.constant 0 : i32
    %c0_i32_0 = arith.constant 0 : i32
    %c0_i32_1 = arith.constant 0 : i32
    return %c0_i32, %c0_i32_0 : i32, i32
  }
  func.func @transform_3(%arg0: i32) -> (i32, i32, i32) {
    %c0_i32 = arith.constant 0 : i32
    %c0_i32_0 = arith.constant 0 : i32
    %c0_i32_1 = arith.constant 0 : i32
    %c0_i32_2 = arith.constant 0 : i32
    return %c0_i32, %c0_i32_0, %c0_i32_1 : i32, i32, i32
  }
  func.func @transform_4(%arg0: i32) -> (i32, i32) {
    %c0_i32 = arith.constant 0 : i32
    %c0_i32_0 = arith.constant 0 : i32
    %c0_i32_1 = arith.constant 0 : i32
    return %c0_i32, %c0_i32_0 : i32, i32
  }
  func.func @transform_5(%arg0: i32) -> (i32, i32, i32) {
    %c0_i32 = arith.constant 0 : i32
    %c0_i32_0 = arith.constant 0 : i32
    %c0_i32_1 = arith.constant 0 : i32
    return %arg0, %c0_i32, %c0_i32_0 : i32, i32, i32
  }
}

</mosaic_0001>

<llo_original>
// kernel: tpu_custom_call.1
$region0: #{tpu_custom_call.1}
  #allocation0 [shape = 'u32[]', space=smem, size = 0x4, offset = 0x4, fixed_abs, tag = 'smem constant byte address 0x4 - core index']
  #allocation1 [shape = 'u32[144,128]{1,0:T(1,128)}', space=vmem, size = 0x12000, scoped, tag = 'internal scratch']
  %s0 = inlined_call_operand.vmem [shape: f32[1,8,64], index: 0, kind: input, shape index: {}]
  %s1 = inlined_call_operand.vmem [shape: f32[24,8], index: 1, kind: input, shape index: {}]
  %s2 = inlined_call_operand.vmem [shape: f32[24,24], index: 2, kind: input, shape index: {}]
  %s3 = inlined_call_operand.hbm [shape: bf16[7,64,128], index: 3, kind: input, shape index: {}]
  %s4 = inlined_call_operand.vmem [shape: f32[1,128], index: 4, kind: input, shape index: {}]
  %s5 = inlined_call_operand.hbm [shape: f32[1,8,128], index: 5, kind: output, shape index: {}]
  %s6 = sld [smem:[#allocation0]]
  $region34: #{tpu_custom_call.1} parent=0
    _
  %s8 = ssub.s32 1, %s6
  %s9 = scalar_select 0, %s8, %s6
  $region1: #{tpu_custom_call.1} parent=0
    #allocation2 [shape = 'u8[114688]{0}', space=vmem, size = 0x1c000, scoped, tag = 'input window, operand 3, single buffered']
    #allocation3 [shape = 's32[1]{0}', space=sflag, size = 0x4, scoped, tag = 'scoped memory for tpu_custom_call.1']
    #allocation4 [shape = 's32[1]{0}', space=sflag, size = 0x4, scoped, tag = 'scoped memory for tpu_custom_call.1']
    #allocation5 [shape = 'u8[4096]{0}', space=vmem, size = 0x1000, scoped, tag = 'output window, operand 0, single buffered']
    %10 = vsyncpa [#allocation3], 0
    %11 = vsyncpa [#allocation4], 0
    // Predicated region
    $region2: #{tpu_custom_call.1} parent=1 // pred_check
      _
    $region3: #{tpu_custom_call.1} parent=1 // pred_check_branch
      %13 = sbr.rel (0) target = $region5
    $region4: #{tpu_custom_call.1} parent=1 // pred_region
      _
    $region5: #{tpu_custom_call.1} parent=1 // pred_fallthru
      _
    // Predicated region
    $region6: #{tpu_custom_call.1} parent=1 // pred_check
      _
    $region7: #{tpu_custom_call.1} parent=1 // pred_check_branch
      %15 = sbr.rel (0) target = $region9
    $region8: #{tpu_custom_call.1} parent=1 // pred_region
      _
    $region9: #{tpu_custom_call.1} parent=1 // pred_fallthru
      _
    // Predicated region
    $region10: #{tpu_custom_call.1} parent=1 // pred_check
      _
    $region11: #{tpu_custom_call.1} parent=1 // pred_check_branch
      %17 = sbr.rel (0) target = $region13
    $region12: #{tpu_custom_call.1} parent=1 // pred_region
      _
    $region13: #{tpu_custom_call.1} parent=1 // pred_fallthru
      _
    // Predicated region
    $region14: #{tpu_custom_call.1} parent=1 // pred_check
      _
    $region15: #{tpu_custom_call.1} parent=1 // pred_check_branch
      %19 = sbr.rel (0) target = $region17
    $region16: #{tpu_custom_call.1} parent=1 // pred_region
      %s21 = ssub.s32 3584, 3584
      %22 = vsyncadd [#allocation3], %s21
      %s23 = sshll.u32 [#allocation2], 4
      %s24 = int_to_ptr.vmem [resolvable:$true] %s23
      %29 = dma.hbm_to_vmem [thread:$0]  %s3, 3584, %s24, [#allocation3], 64, 64, 4
    $region17: #{tpu_custom_call.1} parent=1 // pred_fallthru
      _
    // Predicated region
    $region18: #{tpu_custom_call.1} parent=1 // pred_check
      _
    $region19: #{tpu_custom_call.1} parent=1 // pred_check_branch
      %31 = sbr.rel (0) target = $region21
    $region20: #{tpu_custom_call.1} parent=1 // pred_region
      _
    $region21: #{tpu_custom_call.1} parent=1 // pred_fallthru
      _
    // Predicated region
    $region22: #{tpu_custom_call.1} parent=1 // pred_check
      _
    $region23: #{tpu_custom_call.1} parent=1 // pred_check_branch
      %33 = sbr.rel (0) target = $region25
    $region24: #{tpu_custom_call.1} parent=1 // pred_region
      %34 = dma.done [#allocation3], 3584
    $region25: #{tpu_custom_call.1} parent=1 // pred_fallthru
      _
    %v36 = vld [vmem:[%s0] sm:$0xff]
    %v37 = vpack.c.bf16 %v36, %v36
    %v38 = vld [vmem:[#allocation2] sm:$0xf]
    %v39 = vld [vmem:[#allocation2 + $0x4] sm:$0xf]
    %v40 = vld [vmem:[#allocation2 + $0x8] sm:$0xf]
    %v41 = vld [vmem:[#allocation2 + $0xc] sm:$0xf]
    %v42 = vld [vmem:[#allocation2 + $0x10] sm:$0xf]
    %v43 = vld [vmem:[#allocation2 + $0x14] sm:$0xf]
    %v44 = vld [vmem:[#allocation2 + $0x18] sm:$0xf]
    %v45 = vld [vmem:[#allocation2 + $0x1c] sm:$0xf]
    %v46 = vld [vmem:[%s1] sm:$0xff]
    %v47 = vld [vmem:[%s1 + $0x8] sm:$0xff]
    %v48 = vld [vmem:[%s1 + $0x10] sm:$0xff]
    %vm49 = vcmask 64512
    %v51 = vsel %vm49, %v46, 0
    %v54 = vsel %vm49, %v47, 0
    %v57 = vsel %vm49, %v48, 0
    %59 = vmatprep.subr.mxu0 0.0
    %60 = vmatpush1.msra.mxu0 0.0
    %61 = vmatprep.subr.mxu0 0.0
    %62 = vmatpush1.msra.mxu0 0.0
    %63 = vmatprep.subr.mxu0 0.0
    %64 = vmatpush1.msra.mxu0 0.0
    %65 = vmatprep.subr.mxu0 0.0
    %66 = vmatpush1.msra.mxu0 0.0
    %67 = vmatprep.subr.mxu0 0.0
    %68 = vmatpush1.msra.mxu0 0.0
    %69 = vmatprep.subr.mxu0 0.0
    %70 = vmatpush1.msra.mxu0 0.0
    %71 = vmatprep.subr.mxu0 0.0
    %72 = vmatpush1.msra.mxu0 0.0
    %73 = vmatprep.subr.mxu0 0.0
    %74 = vmatpush1.msra.mxu0 0.0
    %75 = vmatprep.subr.mxu0 0.0
    %76 = vmatpush1.msra.mxu0 0.0
    %77 = vmatprep.subr.mxu0 0.0
    %78 = vmatpush1.msra.mxu0 0.0
    %79 = vmatprep.subr.mxu0 0.0
    %80 = vmatpush1.msra.mxu0 0.0
    %81 = vmatprep.subr.mxu0 0.0
    %82 = vmatpush1.msra.mxu0 0.0
    %83 = vmatprep.subr.mxu0 0.0
    %84 = vmatpush1.msra.mxu0 0.0
    %85 = vmatprep.subr.mxu0 0.0
    %86 = vmatpush1.msra.mxu0 0.0
    %87 = vmatprep.subr.mxu0 0.0
    %88 = vmatpush1.msra.mxu0 0.0
    %89 = vmatprep.subr.mxu0 0.0
    %90 = vmatpush1.msra.mxu0 %v36
    %91 = vmatprep.subr.mxu0 0.0
    %92 = vmatpush2.msra.mxu0 0.0
    %93 = vmatprep.subr.mxu0 0.0
    %94 = vmatpush2.msra.mxu0 0.0
    %95 = vmatprep.subr.mxu0 0.0
    %96 = vmatpush2.msra.mxu0 0.0
    %97 = vmatprep.subr.mxu0 0.0
    %98 = vmatpush2.msra.mxu0 0.0
    %99 = vmatprep.subr.mxu0 0.0
    %100 = vmatpush2.msra.mxu0 0.0
    %101 = vmatprep.subr.mxu0 0.0
    %102 = vmatpush2.msra.mxu0 0.0
    %103 = vmatprep.subr.mxu0 0.0
    %104 = vmatpush2.msra.mxu0 0.0
    %105 = vmatprep.subr.mxu0 0.0
    %106 = vmatpush2.msra.mxu0 0.0
    %107 = vmatprep.subr.mxu0 0.0
    %108 = vmatpush2.msra.mxu0 0.0
    %109 = vmatprep.subr.mxu0 0.0
    %110 = vmatpush2.msra.mxu0 0.0
    %111 = vmatprep.subr.mxu0 0.0
    %112 = vmatpush2.msra.mxu0 0.0
    %113 = vmatprep.subr.mxu0 0.0
    %114 = vmatpush2.msra.mxu0 0.0
    %115 = vmatprep.subr.mxu0 0.0
    %116 = vmatpush2.msra.mxu0 0.0
    %117 = vmatprep.subr.mxu0 0.0
    %118 = vmatpush2.msra.mxu0 0.0
    %119 = vmatprep.subr.mxu0 0.0
    %120 = vmatpush2.msra.mxu0 0.0
    %121 = vmatprep.subr.mxu0 0.0
    %122 = vmatpush2.msra.mxu0 0.0
    %123 = vmatprep.mubr.f32.mxu0 0.0
    %124 = vmatmul.mubr.f32.gmra.mxu0 %v51
    %v125 = vpop.f32.mrf.mxu0
    %v126 = vadd.f32 0.0, %v125
    %v127 = vpop.f32.mrf.mxu0
    %128 = vmatprep.mubr.f32.mxu0 0.0
    %129 = vmatmul.mubr.f32.gmra.mxu0 %v54
    %v130 = vpop.f32.mrf.mxu0
    %v131 = vadd.f32 0.0, %v130
    %v132 = vpop.f32.mrf.mxu0
    %133 = vmatprep.mubr.f32.mxu0 0.0
    %134 = vmatmul.mubr.f32.gmra.mxu0 %v57
    %v135 = vpop.f32.mrf.mxu0
    %v136 = vadd.f32 0.0, %v135
    %v137 = vpop.f32.mrf.mxu0
    %138 = vdwg.mxu0
    %v139 = vpack.c.bf16 %v126, %v126
    %s140 = scalar_lea.vmem [#allocation2], 32
    %v141 = vld [vmem:[%s140] sm:$0xf]
    %v142 = vld [vmem:[%s140 + $0x4] sm:$0xf]
    %v143 = vld [vmem:[%s140 + $0x8] sm:$0xf]
    %v144 = vld [vmem:[%s140 + $0xc] sm:$0xf]
    %v145 = vld [vmem:[%s140 + $0x10] sm:$0xf]
    %v146 = vld [vmem:[%s140 + $0x14] sm:$0xf]
    %v147 = vld [vmem:[%s140 + $0x18] sm:$0xf]
    %v148 = vld [vmem:[%s140 + $0x1c] sm:$0xf]
    %v157 = vunpack.c.l.b16 %v141
    %v158 = vunpack.c.l.b16 %v142
    %v159 = vunpack.c.l.b16 %v143
    %v160 = vunpack.c.l.b16 %v144
    %v161 = vunpack.c.l.b16 %v145
    %v162 = vunpack.c.l.b16 %v146
    %v163 = vunpack.c.l.b16 %v147
    %v164 = vunpack.c.l.b16 %v148
    %v165 = vpack.c.b16 %v158, %v157
    %v166 = vpack.c.b16 %v160, %v159
    %v167 = vpack.c.b16 %v162, %v161
    %v168 = vpack.c.b16 %v164, %v163
    %vm173 = vcmask 523264
    %v175 = vsel %vm173, %v139, 0
    %177 = vmatprep.subr.bf16.mxu0 0
    %178 = vmatpush1.bf16.msra.mxu0 0
    %179 = vmatprep.subr.bf16.mxu0 0
    %180 = vmatpush1.bf16.msra.mxu0 0
    %181 = vmatprep.subr.bf16.mxu0 0
    %182 = vmatpush1.bf16.msra.mxu0 0
    %183 = vmatprep.subr.bf16.mxu0 0
    %184 = vmatpush1.bf16.msra.mxu0 0
    %185 = vmatprep.subr.bf16.mxu0 0
    %186 = vmatpush1.bf16.msra.mxu0 %v168
    %187 = vmatprep.subr.bf16.mxu0 0
    %188 = vmatpush1.bf16.msra.mxu0 %v167
    %189 = vmatprep.subr.bf16.mxu0 0
    %190 = vmatpush1.bf16.msra.mxu0 %v166
    %191 = vmatprep.subr.bf16.mxu0 0
    %192 = vmatpush1.bf16.msra.mxu0 %v165
    %193 = vmatprep.subr.bf16.mxu0 0
    %194 = vmatpush2.bf16.msra.mxu0 0
    %195 = vmatprep.subr.bf16.mxu0 0
    %196 = vmatpush2.bf16.msra.mxu0 0
    %197 = vmatprep.subr.bf16.mxu0 0
    %198 = vmatpush2.bf16.msra.mxu0 0
    %199 = vmatprep.subr.bf16.mxu0 0
    %200 = vmatpush2.bf16.msra.mxu0 0
    %201 = vmatprep.subr.bf16.mxu0 0
    %202 = vmatpush2.bf16.msra.mxu0 0
    %203 = vmatprep.subr.bf16.mxu0 0
    %204 = vmatpush2.bf16.msra.mxu0 0
    %205 = vmatprep.subr.bf16.mxu0 0
    %206 = vmatpush2.bf16.msra.mxu0 0
    %207 = vmatprep.subr.bf16.mxu0 0
    %208 = vmatpush2.bf16.msra.mxu0 0
    %209 = vmatprep.mubr.bf16.mxu0 0
    %210 = vmatmul.mubr.bf16.gmra.mxu0 %v175
    %v211 = vpop.f32.mrf.mxu0
    %v212 = vadd.f32 0.0, %v211
    %v213 = vpop.f32.mrf.mxu0
    %v214 = vpop.f32.mrf.mxu0
    %v215 = vpop.f32.mrf.mxu0
    %216 = vdwg.mxu0
    %v225 = vunpack.c.l.b16 %v38
    %v226 = vunpack.c.l.b16 %v39
    %v227 = vunpack.c.l.b16 %v40
    %v228 = vunpack.c.l.b16 %v41
    %v229 = vunpack.c.l.b16 %v42
    %v230 = vunpack.c.l.b16 %v43
    %v231 = vunpack.c.l.b16 %v44
    %v232 = vunpack.c.l.b16 %v45
    %v233 = vpack.c.b16 %v226, %v225
    %v234 = vpack.c.b16 %v228, %v227
    %v235 = vpack.c.b16 %v230, %v229
    %v236 = vpack.c.b16 %v232, %v231
    %v242 = vsel %vm173, %v37, 0
    %244 = vmatprep.subr.bf16.mxu0 0
    %245 = vmatpush1.bf16.msra.mxu0 0
    %246 = vmatprep.subr.bf16.mxu0 0
    %247 = vmatpush1.bf16.msra.mxu0 0
    %248 = vmatprep.subr.bf16.mxu0 0
    %249 = vmatpush1.bf16.msra.mxu0 0
    %250 = vmatprep.subr.bf16.mxu0 0
    %251 = vmatpush1.bf16.msra.mxu0 0
    %252 = vmatprep.subr.bf16.mxu0 0
    %253 = vmatpush1.bf16.msra.mxu0 %v236
    %254 = vmatprep.subr.bf16.mxu0 0
    %255 = vmatpush1.bf16.msra.mxu0 %v235
    %256 = vmatprep.subr.bf16.mxu0 0
    %257 = vmatpush1.bf16.msra.mxu0 %v234
    %258 = vmatprep.subr.bf16.mxu0 0
    %259 = vmatpush1.bf16.msra.mxu0 %v233
    %260 = vmatprep.subr.bf16.mxu0 0
    %261 = vmatpush2.bf16.msra.mxu0 0
    %262 = vmatprep.subr.bf16.mxu0 0
    %263 = vmatpush2.bf16.msra.mxu0 0
    %264 = vmatprep.subr.bf16.mxu0 0
    %265 = vmatpush2.bf16.msra.mxu0 0
    %266 = vmatprep.subr.bf16.mxu0 0
    %267 = vmatpush2.bf16.msra.mxu0 0
    %268 = vmatprep.subr.bf16.mxu0 0
    %269 = vmatpush2.bf16.msra.mxu0 0
    %270 = vmatprep.subr.bf16.mxu0 0
    %271 = vmatpush2.bf16.msra.mxu0 0
    %272 = vmatprep.subr.bf16.mxu0 0
    %273 = vmatpush2.bf16.msra.mxu0 0
    %274 = vmatprep.subr.bf16.mxu0 0
    %275 = vmatpush2.bf16.msra.mxu0 0
    %276 = vmatprep.mubr.bf16.mxu0 0
    %277 = vmatmul.mubr.bf16.gmra.mxu0 %v242
    %v278 = vpop.f32.mrf.mxu0
    %v279 = vadd.f32 %v212, %v278
    %v280 = vpop.f32.mrf.mxu0
    %v281 = vpop.f32.mrf.mxu0
    %v282 = vpop.f32.mrf.mxu0
    %283 = vdwg.mxu0
    %v284 = vpack.c.bf16 %v131, %v131
    %s285 = scalar_lea.vmem [#allocation2], 96
    %v286 = vld [vmem:[%s285] sm:$0xf]
    %v287 = vld [vmem:[%s285 + $0x4] sm:$0xf]
    %v288 = vld [vmem:[%s285 + $0x8] sm:$0xf]
    %v289 = vld [vmem:[%s285 + $0xc] sm:$0xf]
    %v290 = vld [vmem:[%s285 + $0x10] sm:$0xf]
    %v291 = vld [vmem:[%s285 + $0x14] sm:$0xf]
    %v292 = vld [vmem:[%s285 + $0x18] sm:$0xf]
    %v293 = vld [vmem:[%s285 + $0x1c] sm:$0xf]
    %v302 = vunpack.c.l.b16 %v286
    %v303 = vunpack.c.l.b16 %v287
    %v304 = vunpack.c.l.b16 %v288
    %v305 = vunpack.c.l.b16 %v289
    %v306 = vunpack.c.l.b16 %v290
    %v307 = vunpack.c.l.b16 %v291
    %v308 = vunpack.c.l.b16 %v292
    %v309 = vunpack.c.l.b16 %v293
    %v310 = vpack.c.b16 %v303, %v302
    %v311 = vpack.c.b16 %v305, %v304
    %v312 = vpack.c.b16 %v307, %v306
    %v313 = vpack.c.b16 %v309, %v308
    %v319 = vsel %vm173, %v284, 0
    %321 = vmatprep.subr.bf16.mxu0 0
    %322 = vmatpush1.bf16.msra.mxu0 0
    %323 = vmatprep.subr.bf16.mxu0 0
    %324 = vmatpush1.bf16.msra.mxu0 0
    %325 = vmatprep.subr.bf16.mxu0 0
    %326 = vmatpush1.bf16.msra.mxu0 0
    %327 = vmatprep.subr.bf16.mxu0 0
    %328 = vmatpush1.bf16.msra.mxu0 0
    %329 = vmatprep.subr.bf16.mxu0 0
    %330 = vmatpush1.bf16.msra.mxu0 %v313
    %331 = vmatprep.subr.bf16.mxu0 0
    %332 = vmatpush1.bf16.msra.mxu0 %v312
    %333 = vmatprep.subr.bf16.mxu0 0
    %334 = vmatpush1.bf16.msra.mxu0 %v311
    %335 = vmatprep.subr.bf16.mxu0 0
    %336 = vmatpush1.bf16.msra.mxu0 %v310
    %337 = vmatprep.subr.bf16.mxu0 0
    %338 = vmatpush2.bf16.msra.mxu0 0
    %339 = vmatprep.subr.bf16.mxu0 0
    %340 = vmatpush2.bf16.msra.mxu0 0
    %341 = vmatprep.subr.bf16.mxu0 0
    %342 = vmatpush2.bf16.msra.mxu0 0
    %343 = vmatprep.subr.bf16.mxu0 0
    %344 = vmatpush2.bf16.msra.mxu0 0
    %345 = vmatprep.subr.bf16.mxu0 0
    %346 = vmatpush2.bf16.msra.mxu0 0
    %347 = vmatprep.subr.bf16.mxu0 0
    %348 = vmatpush2.bf16.msra.mxu0 0
    %349 = vmatprep.subr.bf16.mxu0 0
    %350 = vmatpush2.bf16.msra.mxu0 0
    %351 = vmatprep.subr.bf16.mxu0 0
    %352 = vmatpush2.bf16.msra.mxu0 0
    %353 = vmatprep.mubr.bf16.mxu0 0
    %354 = vmatmul.mubr.bf16.gmra.mxu0 %v319
    %v355 = vpop.f32.mrf.mxu0
    %v356 = vadd.f32 0.0, %v355
    %v357 = vpop.f32.mrf.mxu0
    %v358 = vpop.f32.mrf.mxu0
    %v359 = vpop.f32.mrf.mxu0
    %360 = vdwg.mxu0
    %v361 = vadd.f32 %v279, %v356
    %v362 = vpack.c.bf16 %v136, %v136
    %s363 = scalar_lea.vmem [#allocation2], 160
    %v364 = vld [vmem:[%s363] sm:$0xf]
    %v365 = vld [vmem:[%s363 + $0x4] sm:$0xf]
    %v366 = vld [vmem:[%s363 + $0x8] sm:$0xf]
    %v367 = vld [vmem:[%s363 + $0xc] sm:$0xf]
    %v368 = vld [vmem:[%s363 + $0x10] sm:$0xf]
    %v369 = vld [vmem:[%s363 + $0x14] sm:$0xf]
    %v370 = vld [vmem:[%s363 + $0x18] sm:$0xf]
    %v371 = vld [vmem:[%s363 + $0x1c] sm:$0xf]
    %v380 = vunpack.c.l.b16 %v364
    %v381 = vunpack.c.l.b16 %v365
    %v382 = vunpack.c.l.b16 %v366
    %v383 = vunpack.c.l.b16 %v367
    %v384 = vunpack.c.l.b16 %v368
    %v385 = vunpack.c.l.b16 %v369
    %v386 = vunpack.c.l.b16 %v370
    %v387 = vunpack.c.l.b16 %v371
    %v388 = vpack.c.b16 %v381, %v380
    %v389 = vpack.c.b16 %v383, %v382
    %v390 = vpack.c.b16 %v385, %v384
    %v391 = vpack.c.b16 %v387, %v386
    %v397 = vsel %vm173, %v362, 0
    %399 = vmatprep.subr.bf16.mxu0 0
    %400 = vmatpush1.bf16.msra.mxu0 0
    %401 = vmatprep.subr.bf16.mxu0 0
    %402 = vmatpush1.bf16.msra.mxu0 0
    %403 = vmatprep.subr.bf16.mxu0 0
    %404 = vmatpush1.bf16.msra.mxu0 0
    %405 = vmatprep.subr.bf16.mxu0 0
    %406 = vmatpush1.bf16.msra.mxu0 0
    %407 = vmatprep.subr.bf16.mxu0 0
    %408 = vmatpush1.bf16.msra.mxu0 %v391
    %409 = vmatprep.subr.bf16.mxu0 0
    %410 = vmatpush1.bf16.msra.mxu0 %v390
    %411 = vmatprep.subr.bf16.mxu0 0
    %412 = vmatpush1.bf16.msra.mxu0 %v389
    %413 = vmatprep.subr.bf16.mxu0 0
    %414 = vmatpush1.bf16.msra.mxu0 %v388
    %415 = vmatprep.subr.bf16.mxu0 0
    %416 = vmatpush2.bf16.msra.mxu0 0
    %417 = vmatprep.subr.bf16.mxu0 0
    %418 = vmatpush2.bf16.msra.mxu0 0
    %419 = vmatprep.subr.bf16.mxu0 0
    %420 = vmatpush2.bf16.msra.mxu0 0
    %421 = vmatprep.subr.bf16.mxu0 0
    %422 = vmatpush2.bf16.msra.mxu0 0
    %423 = vmatprep.subr.bf16.mxu0 0
    %424 = vmatpush2.bf16.msra.mxu0 0
    %425 = vmatprep.subr.bf16.mxu0 0
    %426 = vmatpush2.bf16.msra.mxu0 0
    %427 = vmatprep.subr.bf16.mxu0 0
    %428 = vmatpush2.bf16.msra.mxu0 0
    %429 = vmatprep.subr.bf16.mxu0 0
    %430 = vmatpush2.bf16.msra.mxu0 0
    %431 = vmatprep.mubr.bf16.mxu0 0
    %432 = vmatmul.mubr.bf16.gmra.mxu0 %v397
    %v433 = vpop.f32.mrf.mxu0
    %v434 = vadd.f32 0.0, %v433
    %v435 = vpop.f32.mrf.mxu0
    %v436 = vpop.f32.mrf.mxu0
    %v437 = vpop.f32.mrf.mxu0
    %438 = vdwg.mxu0
    %v439 = vadd.f32 %v361, %v434
    %v440 = vld [vmem:[%s2] sm:$0xff]
    %v441 = vld [vmem:[%s2 + $0x8] sm:$0xff]
    %v442 = vld [vmem:[%s2 + $0x10] sm:$0xff]
    %vm443 = vcmask 195584
    %v445 = vsel %vm443, %v440, 0
    %v448 = vsel %vm443, %v441, 0
    %v451 = vsel %vm443, %v442, 0
    %453 = vmatprep.subr.mxu0 0.0
    %454 = vmatpush1.msra.mxu0 0.0
    %455 = vmatprep.subr.mxu0 0.0
    %456 = vmatpush1.msra.mxu0 0.0
    %457 = vmatprep.subr.mxu0 0.0
    %458 = vmatpush1.msra.mxu0 0.0
    %459 = vmatprep.subr.mxu0 0.0
    %460 = vmatpush1.msra.mxu0 0.0
    %461 = vmatprep.subr.mxu0 0.0
    %462 = vmatpush1.msra.mxu0 0.0
    %463 = vmatprep.subr.mxu0 0.0
    %464 = vmatpush1.msra.mxu0 0.0
    %465 = vmatprep.subr.mxu0 0.0
    %466 = vmatpush1.msra.mxu0 0.0
    %467 = vmatprep.subr.mxu0 0.0
    %468 = vmatpush1.msra.mxu0 0.0
    %469 = vmatprep.subr.mxu0 0.0
    %470 = vmatpush1.msra.mxu0 0.0
    %471 = vmatprep.subr.mxu0 0.0
    %472 = vmatpush1.msra.mxu0 0.0
    %473 = vmatprep.subr.mxu0 0.0
    %474 = vmatpush1.msra.mxu0 0.0
    %475 = vmatprep.subr.mxu0 0.0
    %476 = vmatpush1.msra.mxu0 0.0
    %477 = vmatprep.subr.mxu0 0.0
    %478 = vmatpush1.msra.mxu0 0.0
    %479 = vmatprep.subr.mxu0 0.0
    %480 = vmatpush1.msra.mxu0 %v136
    %481 = vmatprep.subr.mxu0 0.0
    %482 = vmatpush1.msra.mxu0 %v131
    %483 = vmatprep.subr.mxu0 0.0
    %484 = vmatpush1.msra.mxu0 %v126
    %485 = vmatprep.subr.mxu0 0.0
    %486 = vmatpush2.msra.mxu0 0.0
    %487 = vmatprep.subr.mxu0 0.0
    %488 = vmatpush2.msra.mxu0 0.0
    %489 = vmatprep.subr.mxu0 0.0
    %490 = vmatpush2.msra.mxu0 0.0
    %491 = vmatprep.subr.mxu0 0.0
    %492 = vmatpush2.msra.mxu0 0.0
    %493 = vmatprep.subr.mxu0 0.0
    %494 = vmatpush2.msra.mxu0 0.0
    %495 = vmatprep.subr.mxu0 0.0
    %496 = vmatpush2.msra.mxu0 0.0
    %497 = vmatprep.subr.mxu0 0.0
    %498 = vmatpush2.msra.mxu0 0.0
    %499 = vmatprep.subr.mxu0 0.0
    %500 = vmatpush2.msra.mxu0 0.0
    %501 = vmatprep.subr.mxu0 0.0
    %502 = vmatpush2.msra.mxu0 0.0
    %503 = vmatprep.subr.mxu0 0.0
    %504 = vmatpush2.msra.mxu0 0.0
    %505 = vmatprep.subr.mxu0 0.0
    %506 = vmatpush2.msra.mxu0 0.0
    %507 = vmatprep.subr.mxu0 0.0
    %508 = vmatpush2.msra.mxu0 0.0
    %509 = vmatprep.subr.mxu0 0.0
    %510 = vmatpush2.msra.mxu0 0.0
    %511 = vmatprep.subr.mxu0 0.0
    %512 = vmatpush2.msra.mxu0 0.0
    %513 = vmatprep.subr.mxu0 0.0
    %514 = vmatpush2.msra.mxu0 0.0
    %515 = vmatprep.subr.mxu0 0.0
    %516 = vmatpush2.msra.mxu0 0.0
    %517 = vmatprep.mubr.f32.mxu0 0.0
    %518 = vmatmul.mubr.f32.gmra.mxu0 %v445
    %v519 = vpop.f32.mrf.mxu0
    %v520 = vadd.f32 0.0, %v519
    %v521 = vpop.f32.mrf.mxu0
    %522 = vmatprep.mubr.f32.mxu0 0.0
    %523 = vmatmul.mubr.f32.gmra.mxu0 %v448
    %v524 = vpop.f32.mrf.mxu0
    %v525 = vadd.f32 0.0, %v524
    %v526 = vpop.f32.mrf.mxu0
    %527 = vmatprep.mubr.f32.mxu0 0.0
    %528 = vmatmul.mubr.f32.gmra.mxu0 %v451
    %v529 = vpop.f32.mrf.mxu0
    %v530 = vadd.f32 0.0, %v529
    %v531 = vpop.f32.mrf.mxu0
    %532 = vdwg.mxu0
    %v533 = vpack.c.bf16 %v520, %v520
    %s534 = scalar_lea.vmem [#allocation2], 64
    %v535 = vld [vmem:[%s534] sm:$0xf]
    %v536 = vld [vmem:[%s534 + $0x4] sm:$0xf]
    %v537 = vld [vmem:[%s534 + $0x8] sm:$0xf]
    %v538 = vld [vmem:[%s534 + $0xc] sm:$0xf]
    %v539 = vld [vmem:[%s534 + $0x10] sm:$0xf]
    %v540 = vld [vmem:[%s534 + $0x14] sm:$0xf]
    %v541 = vld [vmem:[%s534 + $0x18] sm:$0xf]
    %v542 = vld [vmem:[%s534 + $0x1c] sm:$0xf]
    %v551 = vunpack.c.l.b16 %v535
    %v552 = vunpack.c.l.b16 %v536
    %v553 = vunpack.c.l.b16 %v537
    %v554 = vunpack.c.l.b16 %v538
    %v555 = vunpack.c.l.b16 %v539
    %v556 = vunpack.c.l.b16 %v540
    %v557 = vunpack.c.l.b16 %v541
    %v558 = vunpack.c.l.b16 %v542
    %v559 = vpack.c.b16 %v552, %v551
    %v560 = vpack.c.b16 %v554, %v553
    %v561 = vpack.c.b16 %v556, %v555
    %v562 = vpack.c.b16 %v558, %v557
    %v568 = vsel %vm173, %v533, 0
    %570 = vmatprep.subr.bf16.mxu0 0
    %571 = vmatpush1.bf16.msra.mxu0 0
    %572 = vmatprep.subr.bf16.mxu0 0
    %573 = vmatpush1.bf16.msra.mxu0 0
    %574 = vmatprep.subr.bf16.mxu0 0
    %575 = vmatpush1.bf16.msra.mxu0 0
    %576 = vmatprep.subr.bf16.mxu0 0
    %577 = vmatpush1.bf16.msra.mxu0 0
    %578 = vmatprep.subr.bf16.mxu0 0
    %579 = vmatpush1.bf16.msra.mxu0 %v562
    %580 = vmatprep.subr.bf16.mxu0 0
    %581 = vmatpush1.bf16.msra.mxu0 %v561
    %582 = vmatprep.subr.bf16.mxu0 0
    %583 = vmatpush1.bf16.msra.mxu0 %v560
    %584 = vmatprep.subr.bf16.mxu0 0
    %585 = vmatpush1.bf16.msra.mxu0 %v559
    %586 = vmatprep.subr.bf16.mxu0 0
    %587 = vmatpush2.bf16.msra.mxu0 0
    %588 = vmatprep.subr.bf16.mxu0 0
    %589 = vmatpush2.bf16.msra.mxu0 0
    %590 = vmatprep.subr.bf16.mxu0 0
    %591 = vmatpush2.bf16.msra.mxu0 0
    %592 = vmatprep.subr.bf16.mxu0 0
    %593 = vmatpush2.bf16.msra.mxu0 0
    %594 = vmatprep.subr.bf16.mxu0 0
    %595 = vmatpush2.bf16.msra.mxu0 0
    %596 = vmatprep.subr.bf16.mxu0 0
    %597 = vmatpush2.bf16.msra.mxu0 0
    %598 = vmatprep.subr.bf16.mxu0 0
    %599 = vmatpush2.bf16.msra.mxu0 0
    %600 = vmatprep.subr.bf16.mxu0 0
    %601 = vmatpush2.bf16.msra.mxu0 0
    %602 = vmatprep.mubr.bf16.mxu0 0
    %603 = vmatmul.mubr.bf16.gmra.mxu0 %v568
    %v604 = vpop.f32.mrf.mxu0
    %v605 = vadd.f32 0.0, %v604
    %v606 = vpop.f32.mrf.mxu0
    %v607 = vpop.f32.mrf.mxu0
    %v608 = vpop.f32.mrf.mxu0
    %609 = vdwg.mxu0
    %v610 = vadd.f32 %v439, %v605
    %v611 = vpack.c.bf16 %v525, %v525
    %s612 = scalar_lea.vmem [#allocation2], 128
    %v613 = vld [vmem:[%s612] sm:$0xf]
    %v614 = vld [vmem:[%s612 + $0x4] sm:$0xf]
    %v615 = vld [vmem:[%s612 + $0x8] sm:$0xf]
    %v616 = vld [vmem:[%s612 + $0xc] sm:$0xf]
    %v617 = vld [vmem:[%s612 + $0x10] sm:$0xf]
    %v618 = vld [vmem:[%s612 + $0x14] sm:$0xf]
    %v619 = vld [vmem:[%s612 + $0x18] sm:$0xf]
    %v620 = vld [vmem:[%s612 + $0x1c] sm:$0xf]
    %v629 = vunpack.c.l.b16 %v613
    %v630 = vunpack.c.l.b16 %v614
    %v631 = vunpack.c.l.b16 %v615
    %v632 = vunpack.c.l.b16 %v616
    %v633 = vunpack.c.l.b16 %v617
    %v634 = vunpack.c.l.b16 %v618
    %v635 = vunpack.c.l.b16 %v619
    %v636 = vunpack.c.l.b16 %v620
    %v637 = vpack.c.b16 %v630, %v629
    %v638 = vpack.c.b16 %v632, %v631
    %v639 = vpack.c.b16 %v634, %v633
    %v640 = vpack.c.b16 %v636, %v635
    %v646 = vsel %vm173, %v611, 0
    %648 = vmatprep.subr.bf16.mxu0 0
    %649 = vmatpush1.bf16.msra.mxu0 0
    %650 = vmatprep.subr.bf16.mxu0 0
    %651 = vmatpush1.bf16.msra.mxu0 0
    %652 = vmatprep.subr.bf16.mxu0 0
    %653 = vmatpush1.bf16.msra.mxu0 0
    %654 = vmatprep.subr.bf16.mxu0 0
    %655 = vmatpush1.bf16.msra.mxu0 0
    %656 = vmatprep.subr.bf16.mxu0 0
    %657 = vmatpush1.bf16.msra.mxu0 %v640
    %658 = vmatprep.subr.bf16.mxu0 0
    %659 = vmatpush1.bf16.msra.mxu0 %v639
    %660 = vmatprep.subr.bf16.mxu0 0
    %661 = vmatpush1.bf16.msra.mxu0 %v638
    %662 = vmatprep.subr.bf16.mxu0 0
    %663 = vmatpush1.bf16.msra.mxu0 %v637
    %664 = vmatprep.subr.bf16.mxu0 0
    %665 = vmatpush2.bf16.msra.mxu0 0
    %666 = vmatprep.subr.bf16.mxu0 0
    %667 = vmatpush2.bf16.msra.mxu0 0
    %668 = vmatprep.subr.bf16.mxu0 0
    %669 = vmatpush2.bf16.msra.mxu0 0
    %670 = vmatprep.subr.bf16.mxu0 0
    %671 = vmatpush2.bf16.msra.mxu0 0
    %672 = vmatprep.subr.bf16.mxu0 0
    %673 = vmatpush2.bf16.msra.mxu0 0
    %674 = vmatprep.subr.bf16.mxu0 0
    %675 = vmatpush2.bf16.msra.mxu0 0
    %676 = vmatprep.subr.bf16.mxu0 0
    %677 = vmatpush2.bf16.msra.mxu0 0
    %678 = vmatprep.subr.bf16.mxu0 0
    %679 = vmatpush2.bf16.msra.mxu0 0
    %680 = vmatprep.mubr.bf16.mxu0 0
    %681 = vmatmul.mubr.bf16.gmra.mxu0 %v646
    %v682 = vpop.f32.mrf.mxu0
    %v683 = vadd.f32 0.0, %v682
    %v684 = vpop.f32.mrf.mxu0
    %v685 = vpop.f32.mrf.mxu0
    %v686 = vpop.f32.mrf.mxu0
    %687 = vdwg.mxu0
    %v688 = vadd.f32 %v610, %v683
    %v689 = vpack.c.bf16 %v530, %v530
    %s690 = scalar_lea.vmem [#allocation2], 192
    %v691 = vld [vmem:[%s690] sm:$0xf]
    %v692 = vld [vmem:[%s690 + $0x4] sm:$0xf]
    %v693 = vld [vmem:[%s690 + $0x8] sm:$0xf]
    %v694 = vld [vmem:[%s690 + $0xc] sm:$0xf]
    %v695 = vld [vmem:[%s690 + $0x10] sm:$0xf]
    %v696 = vld [vmem:[%s690 + $0x14] sm:$0xf]
    %v697 = vld [vmem:[%s690 + $0x18] sm:$0xf]
    %v698 = vld [vmem:[%s690 + $0x1c] sm:$0xf]
    %v707 = vunpack.c.l.b16 %v691
    %v708 = vunpack.c.l.b16 %v692
    %v709 = vunpack.c.l.b16 %v693
    %v710 = vunpack.c.l.b16 %v694
    %v711 = vunpack.c.l.b16 %v695
    %v712 = vunpack.c.l.b16 %v696
    %v713 = vunpack.c.l.b16 %v697
    %v714 = vunpack.c.l.b16 %v698
    %v715 = vpack.c.b16 %v708, %v707
    %v716 = vpack.c.b16 %v710, %v709
    %v717 = vpack.c.b16 %v712, %v711
    %v718 = vpack.c.b16 %v714, %v713
    %v724 = vsel %vm173, %v689, 0
    %726 = vmatprep.subr.bf16.mxu0 0
    %727 = vmatpush1.bf16.msra.mxu0 0
    %728 = vmatprep.subr.bf16.mxu0 0
    %729 = vmatpush1.bf16.msra.mxu0 0
    %730 = vmatprep.subr.bf16.mxu0 0
    %731 = vmatpush1.bf16.msra.mxu0 0
    %732 = vmatprep.subr.bf16.mxu0 0
    %733 = vmatpush1.bf16.msra.mxu0 0
    %734 = vmatprep.subr.bf16.mxu0 0
    %735 = vmatpush1.bf16.msra.mxu0 %v718
    %736 = vmatprep.subr.bf16.mxu0 0
    %737 = vmatpush1.bf16.msra.mxu0 %v717
    %738 = vmatprep.subr.bf16.mxu0 0
    %739 = vmatpush1.bf16.msra.mxu0 %v716
    %740 = vmatprep.subr.bf16.mxu0 0
    %741 = vmatpush1.bf16.msra.mxu0 %v715
    %742 = vmatprep.subr.bf16.mxu0 0
    %743 = vmatpush2.bf16.msra.mxu0 0
    %744 = vmatprep.subr.bf16.mxu0 0
    %745 = vmatpush2.bf16.msra.mxu0 0
    %746 = vmatprep.subr.bf16.mxu0 0
    %747 = vmatpush2.bf16.msra.mxu0 0
    %748 = vmatprep.subr.bf16.mxu0 0
    %749 = vmatpush2.bf16.msra.mxu0 0
    %750 = vmatprep.subr.bf16.mxu0 0
    %751 = vmatpush2.bf16.msra.mxu0 0
    %752 = vmatprep.subr.bf16.mxu0 0
    %753 = vmatpush2.bf16.msra.mxu0 0
    %754 = vmatprep.subr.bf16.mxu0 0
    %755 = vmatpush2.bf16.msra.mxu0 0
    %756 = vmatprep.subr.bf16.mxu0 0
    %757 = vmatpush2.bf16.msra.mxu0 0
    %758 = vmatprep.mubr.bf16.mxu0 0
    %759 = vmatmul.mubr.bf16.gmra.mxu0 %v724
    %v760 = vpop.f32.mrf.mxu0
    %v761 = vadd.f32 0.0, %v760
    %v762 = vpop.f32.mrf.mxu0
    %v763 = vpop.f32.mrf.mxu0
    %v764 = vpop.f32.mrf.mxu0
    %765 = vdwg.mxu0
    %v766 = vadd.f32 %v688, %v761
    %v767 = vld [vmem:[%s4] sm:$0x1]
    %v769 = vlaneseq
    %v770 = vshrl.u32 %v769, 7
    %v771 = vsub.s32 0, %v770
    %v772 = vrot.slane %v767, %v771
    %v774 = vadd.f32 %v766, %v772
    %775 = vst [vmem:[#allocation5] sm:$0xff] %v774
    // Predicated region
    $region26: #{tpu_custom_call.1} parent=1 // pred_check
      _
    $region27: #{tpu_custom_call.1} parent=1 // pred_check_branch
      %777 = sbr.rel (0) target = $region29
    $region28: #{tpu_custom_call.1} parent=1 // pred_region
      %s779 = ssub.s32 128, 128
      %780 = vsyncadd [#allocation4], %s779
      %s782 = sshll.u32 [#allocation5], 4
      %s783 = int_to_ptr.vmem [resolvable:$true] %s782
      %785 = dma.vmem_to_hbm [thread:$0]  %s783, 128, %s5, [#allocation4]
    $region29: #{tpu_custom_call.1} parent=1 // pred_fallthru
      _
    // Predicated region
    $region30: #{tpu_custom_call.1} parent=1 // pred_check
      _
    $region31: #{tpu_custom_call.1} parent=1 // pred_check_branch
      %787 = sbr.rel (0) target = $region33
    $region32: #{tpu_custom_call.1} parent=1 // pred_region
      %788 = dma.done [#allocation4], 128
    $region33: #{tpu_custom_call.1} parent=1 // pred_fallthru
      _
    %789 = vsyncpa [#allocation3], 1
    %790 = vsyncpa [#allocation4], 1

// kernel: tpu_custom_call.1
$region0: #{tpu_custom_call.1}
  #allocation0 [shape = 'u32[]', space=smem, size = 0x4, offset = 0x4, fixed_abs, tag = 'smem constant byte address 0x4 - core index']
  #allocation1 [shape = 'u32[144,128]{1,0:T(1,128)}', space=vmem, size = 0x12000, scoped, tag = 'internal scratch']
  %s0 = inlined_call_operand.vmem [shape: f32[1,8,64], index: 0, kind: input, shape index: {}]
  %s1 = inlined_call_operand.vmem [shape: f32[24,8], index: 1, kind: input, shape index: {}]
  %s2 = inlined_call_operand.vmem [shape: f32[24,24], index: 2, kind: input, shape index: {}]
  %s3 = inlined_call_operand.hbm [shape: bf16[7,64,128], index: 3, kind: input, shape index: {}]
  %s4 = inlined_call_operand.vmem [shape: f32[1,128], index: 4, kind: input, shape index: {}]
  %s5 = inlined_call_operand.hbm [shape: f32[1,8,128], index: 5, kind: output, shape index: {}]
  %s6 = sld [smem:[#allocation0]]
  $region34: #{tpu_custom_call.1} parent=0
    _
  %s8 = ssub.s32 1, %s6
  %s9 = scalar_select 0, %s8, %s6
  $region1: #{tpu_custom_call.1} parent=0
    #allocation2 [shape = 'u8[114688]{0}', space=vmem, size = 0x1c000, scoped, tag = 'input window, operand 3, single buffered']
    #allocation3 [shape = 's32[1]{0}', space=sflag, size = 0x4, scoped, tag = 'scoped memory for tpu_custom_call.1']
    #allocation4 [shape = 's32[1]{0}', space=sflag, size = 0x4, scoped, tag = 'scoped memory for tpu_custom_call.1']
    #allocation5 [shape = 'u8[4096]{0}', space=vmem, size = 0x1000, scoped, tag = 'output window, operand 0, single buffered']
    %10 = vsyncpa [#allocation3], 0
    %11 = vsyncpa [#allocation4], 0
    // Predicated region
    $region2: #{tpu_custom_call.1} parent=1 // pred_check
      _
    $region3: #{tpu_custom_call.1} parent=1 // pred_check_branch
      %13 = sbr.rel (0) target = $region5
    $region4: #{tpu_custom_call.1} parent=1 // pred_region
      _
    $region5: #{tpu_custom_call.1} parent=1 // pred_fallthru
      _
    // Predicated region
    $region6: #{tpu_custom_call.1} parent=1 // pred_check
      _
    $region7: #{tpu_custom_call.1} parent=1 // pred_check_branch
      %15 = sbr.rel (0) target = $region9
    $region8: #{tpu_custom_call.1} parent=1 // pred_region
      _
    $region9: #{tpu_custom_call.1} parent=1 // pred_fallthru
      _
    // Predicated region
    $region10: #{tpu_custom_call.1} parent=1 // pred_check
      _
    $region11: #{tpu_custom_call.1} parent=1 // pred_check_branch
      %17 = sbr.rel (0) target = $region13
    $region12: #{tpu_custom_call.1} parent=1 // pred_region
      _
    $region13: #{tpu_custom_call.1} parent=1 // pred_fallthru
      _
    // Predicated region
    $region14: #{tpu_custom_call.1} parent=1 // pred_check
      _
    $region15: #{tpu_custom_call.1} parent=1 // pred_check_branch
      %19 = sbr.rel (0) target = $region17
    $region16: #{tpu_custom_call.1} parent=1 // pred_region
      %s21 = ssub.s32 3584, 3584
      %22 = vsyncadd [#allocation3], %s21
      %s23 = sshll.u32 [#allocation2], 4
      %s24 = int_to_ptr.vmem [resolvable:$true] %s23
      %29 = dma.hbm_to_vmem [thread:$0]  %s3, 3584, %s24, [#allocation3], 64, 64, 4
    $region17: #{tpu_custom_call.1} parent=1 // pred_fallthru
      _
    // Predicated region
    $region18: #{tpu_custom_call.1} parent=1 // pred_check
      _
    $region19: #{tpu_custom_call.1} parent=1 // pred_check_branch
      %31 = sbr.rel (0) target = $region21
    $region20: #{tpu_custom_call.1} parent=1 // pred_region
      _
    $region21: #{tpu_custom_call.1} parent=1 // pred_fallthru
      _
    // Predicated region
    $region22: #{tpu_custom_call.1} parent=1 // pred_check
      _
    $region23: #{tpu_custom_call.1} parent=1 // pred_check_branch
      %33 = sbr.rel (0) target = $region25
    $region24: #{tpu_custom_call.1} parent=1 // pred_region
      %34 = dma.done [#allocation3], 3584
    $region25: #{tpu_custom_call.1} parent=1 // pred_fallthru
      _
    %v36 = vld [vmem:[%s0] sm:$0xff]
    %v37 = vpack.c.bf16 %v36, %v36
    %v38 = vld [vmem:[#allocation2] sm:$0xf]
    %v39 = vld [vmem:[#allocation2 + $0x4] sm:$0xf]
    %v40 = vld [vmem:[#allocation2 + $0x8] sm:$0xf]
    %v41 = vld [vmem:[#allocation2 + $0xc] sm:$0xf]
    %v42 = vld [vmem:[#allocation2 + $0x10] sm:$0xf]
    %v43 = vld [vmem:[#allocation2 + $0x14] sm:$0xf]
    %v44 = vld [vmem:[#allocation2 + $0x18] sm:$0xf]
    %v45 = vld [vmem:[#allocation2 + $0x1c] sm:$0xf]
    %v46 = vld [vmem:[%s1] sm:$0xff]
    %v47 = vld [vmem:[%s1 + $0x8] sm:$0xff]
    %v48 = vld [vmem:[%s1 + $0x10] sm:$0xff]
    %vm49 = vcmask 64512
    %v51 = vsel %vm49, %v46, 0
    %v54 = vsel %vm49, %v47, 0
    %v57 = vsel %vm49, %v48, 0
    %59 = vmatprep.subr.mxu0 0.0
    %60 = vmatpush1.msra.mxu0 0.0
    %61 = vmatprep.subr.mxu0 0.0
    %62 = vmatpush1.msra.mxu0 0.0
    %63 = vmatprep.subr.mxu0 0.0
    %64 = vmatpush1.msra.mxu0 0.0
    %65 = vmatprep.subr.mxu0 0.0
    %66 = vmatpush1.msra.mxu0 0.0
    %67 = vmatprep.subr.mxu0 0.0
    %68 = vmatpush1.msra.mxu0 0.0
    %69 = vmatprep.subr.mxu0 0.0
    %70 = vmatpush1.msra.mxu0 0.0
    %71 = vmatprep.subr.mxu0 0.0
    %72 = vmatpush1.msra.mxu0 0.0
    %73 = vmatprep.subr.mxu0 0.0
    %74 = vmatpush1.msra.mxu0 0.0
    %75 = vmatprep.subr.mxu0 0.0
    %76 = vmatpush1.msra.mxu0 0.0
    %77 = vmatprep.subr.mxu0 0.0
    %78 = vmatpush1.msra.mxu0 0.0
    %79 = vmatprep.subr.mxu0 0.0
    %80 = vmatpush1.msra.mxu0 0.0
    %81 = vmatprep.subr.mxu0 0.0
    %82 = vmatpush1.msra.mxu0 0.0
    %83 = vmatprep.subr.mxu0 0.0
    %84 = vmatpush1.msra.mxu0 0.0
    %85 = vmatprep.subr.mxu0 0.0
    %86 = vmatpush1.msra.mxu0 0.0
    %87 = vmatprep.subr.mxu0 0.0
    %88 = vmatpush1.msra.mxu0 0.0
    %89 = vmatprep.subr.mxu0 0.0
    %90 = vmatpush1.msra.mxu0 %v36
    %91 = vmatprep.subr.mxu0 0.0
    %92 = vmatpush2.msra.mxu0 0.0
    %93 = vmatprep.subr.mxu0 0.0
    %94 = vmatpush2.msra.mxu0 0.0
    %95 = vmatprep.subr.mxu0 0.0
    %96 = vmatpush2.msra.mxu0 0.0
    %97 = vmatprep.subr.mxu0 0.0
    %98 = vmatpush2.msra.mxu0 0.0
    %99 = vmatprep.subr.mxu0 0.0
    %100 = vmatpush2.msra.mxu0 0.0
    %101 = vmatprep.subr.mxu0 0.0
    %102 = vmatpush2.msra.mxu0 0.0
    %103 = vmatprep.subr.mxu0 0.0
    %104 = vmatpush2.msra.mxu0 0.0
    %105 = vmatprep.subr.mxu0 0.0
    %106 = vmatpush2.msra.mxu0 0.0
    %107 = vmatprep.subr.mxu0 0.0
    %108 = vmatpush2.msra.mxu0 0.0
    %109 = vmatprep.subr.mxu0 0.0
    %110 = vmatpush2.msra.mxu0 0.0
    %111 = vmatprep.subr.mxu0 0.0
    %112 = vmatpush2.msra.mxu0 0.0
    %113 = vmatprep.subr.mxu0 0.0
    %114 = vmatpush2.msra.mxu0 0.0
    %115 = vmatprep.subr.mxu0 0.0
    %116 = vmatpush2.msra.mxu0 0.0
    %117 = vmatprep.subr.mxu0 0.0
    %118 = vmatpush2.msra.mxu0 0.0
    %119 = vmatprep.subr.mxu0 0.0
    %120 = vmatpush2.msra.mxu0 0.0
    %121 = vmatprep.subr.mxu0 0.0
    %122 = vmatpush2.msra.mxu0 0.0
    %123 = vmatprep.mubr.f32.mxu0 0.0
    %124 = vmatmul.mubr.f32.gmra.mxu0 %v51
    %v125 = vpop.f32.mrf.mxu0
    %v126 = vadd.f32 0.0, %v125
    %v127 = vpop.f32.mrf.mxu0
    %128 = vmatprep.mubr.f32.mxu0 0.0
    %129 = vmatmul.mubr.f32.gmra.mxu0 %v54
    %v130 = vpop.f32.mrf.mxu0
    %v131 = vadd.f32 0.0, %v130
    %v132 = vpop.f32.mrf.mxu0
    %133 = vmatprep.mubr.f32.mxu0 0.0
    %134 = vmatmul.mubr.f32.gmra.mxu0 %v57
    %v135 = vpop.f32.mrf.mxu0
    %v136 = vadd.f32 0.0, %v135
    %v137 = vpop.f32.mrf.mxu0
    %138 = vdwg.mxu0
    %v139 = vpack.c.bf16 %v126, %v126
    %s140 = scalar_lea.vmem [#allocation2], 32
    %v141 = vld [vmem:[%s140] sm:$0xf]
    %v142 = vld [vmem:[%s140 + $0x4] sm:$0xf]
    %v143 = vld [vmem:[%s140 + $0x8] sm:$0xf]
    %v144 = vld [vmem:[%s140 + $0xc] sm:$0xf]
    %v145 = vld [vmem:[%s140 + $0x10] sm:$0xf]
    %v146 = vld [vmem:[%s140 + $0x14] sm:$0xf]
    %v147 = vld [vmem:[%s140 + $0x18] sm:$0xf]
    %v148 = vld [vmem:[%s140 + $0x1c] sm:$0xf]
    %v157 = vunpack.c.l.b16 %v141
    %v158 = vunpack.c.l.b16 %v142
    %v159 = vunpack.c.l.b16 %v143
    %v160 = vunpack.c.l.b16 %v144
    %v161 = vunpack.c.l.b16 %v145
    %v162 = vunpack.c.l.b16 %v146
    %v163 = vunpack.c.l.b16 %v147
    %v164 = vunpack.c.l.b16 %v148
    %v165 = vpack.c.b16 %v158, %v157
    %v166 = vpack.c.b16 %v160, %v159
    %v167 = vpack.c.b16 %v162, %v161
    %v168 = vpack.c.b16 %v164, %v163
    %vm173 = vcmask 523264
    %v175 = vsel %vm173, %v139, 0
    %177 = vmatprep.subr.bf16.mxu0 0
    %178 = vmatpush1.bf16.msra.mxu0 0
    %179 = vmatprep.subr.bf16.mxu0 0
    %180 = vmatpush1.bf16.msra.mxu0 0
    %181 = vmatprep.subr.bf16.mxu0 0
    %182 = vmatpush1.bf16.msra.mxu0 0
    %183 = vmatprep.subr.bf16.mxu0 0
    %184 = vmatpush1.bf16.msra.mxu0 0
    %185 = vmatprep.subr.bf16.mxu0 0
    %186 = vmatpush1.bf16.msra.mxu0 %v168
    %187 = vmatprep.subr.bf16.mxu0 0
    %188 = vmatpush1.bf16.msra.mxu0 %v167
    %189 = vmatprep.subr.bf16.mxu0 0
    %190 = vmatpush1.bf16.msra.mxu0 %v166
    %191 = vmatprep.subr.bf16.mxu0 0
    %192 = vmatpush1.bf16.msra.mxu0 %v165
    %193 = vmatprep.subr.bf16.mxu0 0
    %194 = vmatpush2.bf16.msra.mxu0 0
    %195 = vmatprep.subr.bf16.mxu0 0
    %196 = vmatpush2.bf16.msra.mxu0 0
    %197 = vmatprep.subr.bf16.mxu0 0
    %198 = vmatpush2.bf16.msra.mxu0 0
    %199 = vmatprep.subr.bf16.mxu0 0
    %200 = vmatpush2.bf16.msra.mxu0 0
    %201 = vmatprep.subr.bf16.mxu0 0
    %202 = vmatpush2.bf16.msra.mxu0 0
    %203 = vmatprep.subr.bf16.mxu0 0
    %204 = vmatpush2.bf16.msra.mxu0 0
    %205 = vmatprep.subr.bf16.mxu0 0
    %206 = vmatpush2.bf16.msra.mxu0 0
    %207 = vmatprep.subr.bf16.mxu0 0
    %208 = vmatpush2.bf16.msra.mxu0 0
    %209 = vmatprep.mubr.bf16.mxu0 0
    %210 = vmatmul.mubr.bf16.gmra.mxu0 %v175
    %v211 = vpop.f32.mrf.mxu0
    %v212 = vadd.f32 0.0, %v211
    %v213 = vpop.f32.mrf.mxu0
    %v214 = vpop.f32.mrf.mxu0
    %v215 = vpop.f32.mrf.mxu0
    %216 = vdwg.mxu0
    %v225 = vunpack.c.l.b16 %v38
    %v226 = vunpack.c.l.b16 %v39
    %v227 = vunpack.c.l.b16 %v40
    %v228 = vunpack.c.l.b16 %v41
    %v229 = vunpack.c.l.b16 %v42
    %v230 = vunpack.c.l.b16 %v43
    %v231 = vunpack.c.l.b16 %v44
    %v232 = vunpack.c.l.b16 %v45
    %v233 = vpack.c.b16 %v226, %v225
    %v234 = vpack.c.b16 %v228, %v227
    %v235 = vpack.c.b16 %v230, %v229
    %v236 = vpack.c.b16 %v232, %v231
    %v242 = vsel %vm173, %v37, 0
    %244 = vmatprep.subr.bf16.mxu0 0
    %245 = vmatpush1.bf16.msra.mxu0 0
    %246 = vmatprep.subr.bf16.mxu0 0
    %247 = vmatpush1.bf16.msra.mxu0 0
    %248 = vmatprep.subr.bf16.mxu0 0
    %249 = vmatpush1.bf16.msra.mxu0 0
    %250 = vmatprep.subr.bf16.mxu0 0
    %251 = vmatpush1.bf16.msra.mxu0 0
    %252 = vmatprep.subr.bf16.mxu0 0
    %253 = vmatpush1.bf16.msra.mxu0 %v236
    %254 = vmatprep.subr.bf16.mxu0 0
    %255 = vmatpush1.bf16.msra.mxu0 %v235
    %256 = vmatprep.subr.bf16.mxu0 0
    %257 = vmatpush1.bf16.msra.mxu0 %v234
    %258 = vmatprep.subr.bf16.mxu0 0
    %259 = vmatpush1.bf16.msra.mxu0 %v233
    %260 = vmatprep.subr.bf16.mxu0 0
    %261 = vmatpush2.bf16.msra.mxu0 0
    %262 = vmatprep.subr.bf16.mxu0 0
    %263 = vmatpush2.bf16.msra.mxu0 0
    %264 = vmatprep.subr.bf16.mxu0 0
    %265 = vmatpush2.bf16.msra.mxu0 0
    %266 = vmatprep.subr.bf16.mxu0 0
    %267 = vmatpush2.bf16.msra.mxu0 0
    %268 = vmatprep.subr.bf16.mxu0 0
    %269 = vmatpush2.bf16.msra.mxu0 0
    %270 = vmatprep.subr.bf16.mxu0 0
    %271 = vmatpush2.bf16.msra.mxu0 0
    %272 = vmatprep.subr.bf16.mxu0 0
    %273 = vmatpush2.bf16.msra.mxu0 0
    %274 = vmatprep.subr.bf16.mxu0 0
    %275 = vmatpush2.bf16.msra.mxu0 0
    %276 = vmatprep.mubr.bf16.mxu0 0
    %277 = vmatmul.mubr.bf16.gmra.mxu0 %v242
    %v278 = vpop.f32.mrf.mxu0
    %v279 = vadd.f32 %v212, %v278
    %v280 = vpop.f32.mrf.mxu0
    %v281 = vpop.f32.mrf.mxu0
    %v282 = vpop.f32.mrf.mxu0
    %283 = vdwg.mxu0
    %v284 = vpack.c.bf16 %v131, %v131
    %s285 = scalar_lea.vmem [#allocation2], 96
    %v286 = vld [vmem:[%s285] sm:$0xf]
    %v287 = vld [vmem:[%s285 + $0x4] sm:$0xf]
    %v288 = vld [vmem:[%s285 + $0x8] sm:$0xf]
    %v289 = vld [vmem:[%s285 + $0xc] sm:$0xf]
    %v290 = vld [vmem:[%s285 + $0x10] sm:$0xf]
    %v291 = vld [vmem:[%s285 + $0x14] sm:$0xf]
    %v292 = vld [vmem:[%s285 + $0x18] sm:$0xf]
    %v293 = vld [vmem:[%s285 + $0x1c] sm:$0xf]
    %v302 = vunpack.c.l.b16 %v286
    %v303 = vunpack.c.l.b16 %v287
    %v304 = vunpack.c.l.b16 %v288
    %v305 = vunpack.c.l.b16 %v289
    %v306 = vunpack.c.l.b16 %v290
    %v307 = vunpack.c.l.b16 %v291
    %v308 = vunpack.c.l.b16 %v292
    %v309 = vunpack.c.l.b16 %v293
    %v310 = vpack.c.b16 %v303, %v302
    %v311 = vpack.c.b16 %v305, %v304
    %v312 = vpack.c.b16 %v307, %v306
    %v313 = vpack.c.b16 %v309, %v308
    %v319 = vsel %vm173, %v284, 0
    %321 = vmatprep.subr.bf16.mxu0 0
    %322 = vmatpush1.bf16.msra.mxu0 0
    %323 = vmatprep.subr.bf16.mxu0 0
    %324 = vmatpush1.bf16.msra.mxu0 0
    %325 = vmatprep.subr.bf16.mxu0 0
    %326 = vmatpush1.bf16.msra.mxu0 0
    %327 = vmatprep.subr.bf16.mxu0 0
    %328 = vmatpush1.bf16.msra.mxu0 0
    %329 = vmatprep.subr.bf16.mxu0 0
    %330 = vmatpush1.bf16.msra.mxu0 %v313
    %331 = vmatprep.subr.bf16.mxu0 0
    %332 = vmatpush1.bf16.msra.mxu0 %v312
    %333 = vmatprep.subr.bf16.mxu0 0
    %334 = vmatpush1.bf16.msra.mxu0 %v311
    %335 = vmatprep.subr.bf16.mxu0 0
    %336 = vmatpush1.bf16.msra.mxu0 %v310
    %337 = vmatprep.subr.bf16.mxu0 0
    %338 = vmatpush2.bf16.msra.mxu0 0
    %339 = vmatprep.subr.bf16.mxu0 0
    %340 = vmatpush2.bf16.msra.mxu0 0
    %341 = vmatprep.subr.bf16.mxu0 0
    %342 = vmatpush2.bf16.msra.mxu0 0
    %343 = vmatprep.subr.bf16.mxu0 0
    %344 = vmatpush2.bf16.msra.mxu0 0
    %345 = vmatprep.subr.bf16.mxu0 0
    %346 = vmatpush2.bf16.msra.mxu0 0
    %347 = vmatprep.subr.bf16.mxu0 0
    %348 = vmatpush2.bf16.msra.mxu0 0
    %349 = vmatprep.subr.bf16.mxu0 0
    %350 = vmatpush2.bf16.msra.mxu0 0
    %351 = vmatprep.subr.bf16.mxu0 0
    %352 = vmatpush2.bf16.msra.mxu0 0
    %353 = vmatprep.mubr.bf16.mxu0 0
    %354 = vmatmul.mubr.bf16.gmra.mxu0 %v319
    %v355 = vpop.f32.mrf.mxu0
    %v356 = vadd.f32 0.0, %v355
    %v357 = vpop.f32.mrf.mxu0
    %v358 = vpop.f32.mrf.mxu0
    %v359 = vpop.f32.mrf.mxu0
    %360 = vdwg.mxu0
    %v361 = vadd.f32 %v279, %v356
    %v362 = vpack.c.bf16 %v136, %v136
    %s363 = scalar_lea.vmem [#allocation2], 160
    %v364 = vld [vmem:[%s363] sm:$0xf]
    %v365 = vld [vmem:[%s363 + $0x4] sm:$0xf]
    %v366 = vld [vmem:[%s363 + $0x8] sm:$0xf]
    %v367 = vld [vmem:[%s363 + $0xc] sm:$0xf]
    %v368 = vld [vmem:[%s363 + $0x10] sm:$0xf]
    %v369 = vld [vmem:[%s363 + $0x14] sm:$0xf]
    %v370 = vld [vmem:[%s363 + $0x18] sm:$0xf]
    %v371 = vld [vmem:[%s363 + $0x1c] sm:$0xf]
    %v380 = vunpack.c.l.b16 %v364
    %v381 = vunpack.c.l.b16 %v365
    %v382 = vunpack.c.l.b16 %v366
    %v383 = vunpack.c.l.b16 %v367
    %v384 = vunpack.c.l.b16 %v368
    %v385 = vunpack.c.l.b16 %v369
    %v386 = vunpack.c.l.b16 %v370
    %v387 = vunpack.c.l.b16 %v371
    %v388 = vpack.c.b16 %v381, %v380
    %v389 = vpack.c.b16 %v383, %v382
    %v390 = vpack.c.b16 %v385, %v384
    %v391 = vpack.c.b16 %v387, %v386
    %v397 = vsel %vm173, %v362, 0
    %399 = vmatprep.subr.bf16.mxu0 0
    %400 = vmatpush1.bf16.msra.mxu0 0
    %401 = vmatprep.subr.bf16.mxu0 0
    %402 = vmatpush1.bf16.msra.mxu0 0
    %403 = vmatprep.subr.bf16.mxu0 0
    %404 = vmatpush1.bf16.msra.mxu0 0
    %405 = vmatprep.subr.bf16.mxu0 0
    %406 = vmatpush1.bf16.msra.mxu0 0
    %407 = vmatprep.subr.bf16.mxu0 0
    %408 = vmatpush1.bf16.msra.mxu0 %v391
    %409 = vmatprep.subr.bf16.mxu0 0
    %410 = vmatpush1.bf16.msra.mxu0 %v390
    %411 = vmatprep.subr.bf16.mxu0 0
    %412 = vmatpush1.bf16.msra.mxu0 %v389
    %413 = vmatprep.subr.bf16.mxu0 0
    %414 = vmatpush1.bf16.msra.mxu0 %v388
    %415 = vmatprep.subr.bf16.mxu0 0
    %416 = vmatpush2.bf16.msra.mxu0 0
    %417 = vmatprep.subr.bf16.mxu0 0
    %418 = vmatpush2.bf16.msra.mxu0 0
    %419 = vmatprep.subr.bf16.mxu0 0
    %420 = vmatpush2.bf16.msra.mxu0 0
    %421 = vmatprep.subr.bf16.mxu0 0
    %422 = vmatpush2.bf16.msra.mxu0 0
    %423 = vmatprep.subr.bf16.mxu0 0
    %424 = vmatpush2.bf16.msra.mxu0 0
    %425 = vmatprep.subr.bf16.mxu0 0
    %426 = vmatpush2.bf16.msra.mxu0 0
    %427 = vmatprep.subr.bf16.mxu0 0
    %428 = vmatpush2.bf16.msra.mxu0 0
    %429 = vmatprep.subr.bf16.mxu0 0
    %430 = vmatpush2.bf16.msra.mxu0 0
    %431 = vmatprep.mubr.bf16.mxu0 0
    %432 = vmatmul.mubr.bf16.gmra.mxu0 %v397
    %v433 = vpop.f32.mrf.mxu0
    %v434 = vadd.f32 0.0, %v433
    %v435 = vpop.f32.mrf.mxu0
    %v436 = vpop.f32.mrf.mxu0
    %v437 = vpop.f32.mrf.mxu0
    %438 = vdwg.mxu0
    %v439 = vadd.f32 %v361, %v434
    %v440 = vld [vmem:[%s2] sm:$0xff]
    %v441 = vld [vmem:[%s2 + $0x8] sm:$0xff]
    %v442 = vld [vmem:[%s2 + $0x10] sm:$0xff]
    %vm443 = vcmask 195584
    %v445 = vsel %vm443, %v440, 0
    %v448 = vsel %vm443, %v441, 0
    %v451 = vsel %vm443, %v442, 0
    %453 = vmatprep.subr.mxu0 0.0
    %454 = vmatpush1.msra.mxu0 0.0
    %455 = vmatprep.subr.mxu0 0.0
    %456 = vmatpush1.msra.mxu0 0.0
    %457 = vmatprep.subr.mxu0 0.0
    %458 = vmatpush1.msra.mxu0 0.0
    %459 = vmatprep.subr.mxu0 0.0
    %460 = vmatpush1.msra.mxu0 0.0
    %461 = vmatprep.subr.mxu0 0.0
    %462 = vmatpush1.msra.mxu0 0.0
    %463 = vmatprep.subr.mxu0 0.0
    %464 = vmatpush1.msra.mxu0 0.0
    %465 = vmatprep.subr.mxu0 0.0
    %466 = vmatpush1.msra.mxu0 0.0
    %467 = vmatprep.subr.mxu0 0.0
    %468 = vmatpush1.msra.mxu0 0.0
    %469 = vmatprep.subr.mxu0 0.0
    %470 = vmatpush1.msra.mxu0 0.0
    %471 = vmatprep.subr.mxu0 0.0
    %472 = vmatpush1.msra.mxu0 0.0
    %473 = vmatprep.subr.mxu0 0.0
    %474 = vmatpush1.msra.mxu0 0.0
    %475 = vmatprep.subr.mxu0 0.0
    %476 = vmatpush1.msra.mxu0 0.0
    %477 = vmatprep.subr.mxu0 0.0
    %478 = vmatpush1.msra.mxu0 0.0
    %479 = vmatprep.subr.mxu0 0.0
    %480 = vmatpush1.msra.mxu0 %v136
    %481 = vmatprep.subr.mxu0 0.0
    %482 = vmatpush1.msra.mxu0 %v131
    %483 = vmatprep.subr.mxu0 0.0
    %484 = vmatpush1.msra.mxu0 %v126
    %485 = vmatprep.subr.mxu0 0.0
    %486 = vmatpush2.msra.mxu0 0.0
    %487 = vmatprep.subr.mxu0 0.0
    %488 = vmatpush2.msra.mxu0 0.0
    %489 = vmatprep.subr.mxu0 0.0
    %490 = vmatpush2.msra.mxu0 0.0
    %491 = vmatprep.subr.mxu0 0.0
    %492 = vmatpush2.msra.mxu0 0.0
    %493 = vmatprep.subr.mxu0 0.0
    %494 = vmatpush2.msra.mxu0 0.0
    %495 = vmatprep.subr.mxu0 0.0
    %496 = vmatpush2.msra.mxu0 0.0
    %497 = vmatprep.subr.mxu0 0.0
    %498 = vmatpush2.msra.mxu0 0.0
    %499 = vmatprep.subr.mxu0 0.0
    %500 = vmatpush2.msra.mxu0 0.0
    %501 = vmatprep.subr.mxu0 0.0
    %502 = vmatpush2.msra.mxu0 0.0
    %503 = vmatprep.subr.mxu0 0.0
    %504 = vmatpush2.msra.mxu0 0.0
    %505 = vmatprep.subr.mxu0 0.0
    %506 = vmatpush2.msra.mxu0 0.0
    %507 = vmatprep.subr.mxu0 0.0
    %508 = vmatpush2.msra.mxu0 0.0
    %509 = vmatprep.subr.mxu0 0.0
    %510 = vmatpush2.msra.mxu0 0.0
    %511 = vmatprep.subr.mxu0 0.0
    %512 = vmatpush2.msra.mxu0 0.0
    %513 = vmatprep.subr.mxu0 0.0
    %514 = vmatpush2.msra.mxu0 0.0
    %515 = vmatprep.subr.mxu0 0.0
    %516 = vmatpush2.msra.mxu0 0.0
    %517 = vmatprep.mubr.f32.mxu0 0.0
    %518 = vmatmul.mubr.f32.gmra.mxu0 %v445
    %v519 = vpop.f32.mrf.mxu0
    %v520 = vadd.f32 0.0, %v519
    %v521 = vpop.f32.mrf.mxu0
    %522 = vmatprep.mubr.f32.mxu0 0.0
    %523 = vmatmul.mubr.f32.gmra.mxu0 %v448
    %v524 = vpop.f32.mrf.mxu0
    %v525 = vadd.f32 0.0, %v524
    %v526 = vpop.f32.mrf.mxu0
    %527 = vmatprep.mubr.f32.mxu0 0.0
    %528 = vmatmul.mubr.f32.gmra.mxu0 %v451
    %v529 = vpop.f32.mrf.mxu0
    %v530 = vadd.f32 0.0, %v529
    %v531 = vpop.f32.mrf.mxu0
    %532 = vdwg.mxu0
    %v533 = vpack.c.bf16 %v520, %v520
    %s534 = scalar_lea.vmem [#allocation2], 64
    %v535 = vld [vmem:[%s534] sm:$0xf]
    %v536 = vld [vmem:[%s534 + $0x4] sm:$0xf]
    %v537 = vld [vmem:[%s534 + $0x8] sm:$0xf]
    %v538 = vld [vmem:[%s534 + $0xc] sm:$0xf]
    %v539 = vld [vmem:[%s534 + $0x10] sm:$0xf]
    %v540 = vld [vmem:[%s534 + $0x14] sm:$0xf]
    %v541 = vld [vmem:[%s534 + $0x18] sm:$0xf]
    %v542 = vld [vmem:[%s534 + $0x1c] sm:$0xf]
    %v551 = vunpack.c.l.b16 %v535
    %v552 = vunpack.c.l.b16 %v536
    %v553 = vunpack.c.l.b16 %v537
    %v554 = vunpack.c.l.b16 %v538
    %v555 = vunpack.c.l.b16 %v539
    %v556 = vunpack.c.l.b16 %v540
    %v557 = vunpack.c.l.b16 %v541
    %v558 = vunpack.c.l.b16 %v542
    %v559 = vpack.c.b16 %v552, %v551
    %v560 = vpack.c.b16 %v554, %v553
    %v561 = vpack.c.b16 %v556, %v555
    %v562 = vpack.c.b16 %v558, %v557
    %v568 = vsel %vm173, %v533, 0
    %570 = vmatprep.subr.bf16.mxu0 0
    %571 = vmatpush1.bf16.msra.mxu0 0
    %572 = vmatprep.subr.bf16.mxu0 0
    %573 = vmatpush1.bf16.msra.mxu0 0
    %574 = vmatprep.subr.bf16.mxu0 0
    %575 = vmatpush1.bf16.msra.mxu0 0
    %576 = vmatprep.subr.bf16.mxu0 0
    %577 = vmatpush1.bf16.msra.mxu0 0
    %578 = vmatprep.subr.bf16.mxu0 0
    %579 = vmatpush1.bf16.msra.mxu0 %v562
    %580 = vmatprep.subr.bf16.mxu0 0
    %581 = vmatpush1.bf16.msra.mxu0 %v561
    %582 = vmatprep.subr.bf16.mxu0 0
    %583 = vmatpush1.bf16.msra.mxu0 %v560
    %584 = vmatprep.subr.bf16.mxu0 0
    %585 = vmatpush1.bf16.msra.mxu0 %v559
    %586 = vmatprep.subr.bf16.mxu0 0
    %587 = vmatpush2.bf16.msra.mxu0 0
    %588 = vmatprep.subr.bf16.mxu0 0
    %589 = vmatpush2.bf16.msra.mxu0 0
    %590 = vmatprep.subr.bf16.mxu0 0
    %591 = vmatpush2.bf16.msra.mxu0 0
    %592 = vmatprep.subr.bf16.mxu0 0
    %593 = vmatpush2.bf16.msra.mxu0 0
    %594 = vmatprep.subr.bf16.mxu0 0
    %595 = vmatpush2.bf16.msra.mxu0 0
    %596 = vmatprep.subr.bf16.mxu0 0
    %597 = vmatpush2.bf16.msra.mxu0 0
    %598 = vmatprep.subr.bf16.mxu0 0
    %599 = vmatpush2.bf16.msra.mxu0 0
    %600 = vmatprep.subr.bf16.mxu0 0
    %601 = vmatpush2.bf16.msra.mxu0 0
    %602 = vmatprep.mubr.bf16.mxu0 0
    %603 = vmatmul.mubr.bf16.gmra.mxu0 %v568
    %v604 = vpop.f32.mrf.mxu0
    %v605 = vadd.f32 0.0, %v604
    %v606 = vpop.f32.mrf.mxu0
    %v607 = vpop.f32.mrf.mxu0
    %v608 = vpop.f32.mrf.mxu0
    %609 = vdwg.mxu0
    %v610 = vadd.f32 %v439, %v605
    %v611 = vpack.c.bf16 %v525, %v525
    %s612 = scalar_lea.vmem [#allocation2], 128
    %v613 = vld [vmem:[%s612] sm:$0xf]
    %v614 = vld [vmem:[%s612 + $0x4] sm:$0xf]
    %v615 = vld [vmem:[%s612 + $0x8] sm:$0xf]
    %v616 = vld [vmem:[%s612 + $0xc] sm:$0xf]
    %v617 = vld [vmem:[%s612 + $0x10] sm:$0xf]
    %v618 = vld [vmem:[%s612 + $0x14] sm:$0xf]
    %v619 = vld [vmem:[%s612 + $0x18] sm:$0xf]
    %v620 = vld [vmem:[%s612 + $0x1c] sm:$0xf]
    %v629 = vunpack.c.l.b16 %v613
    %v630 = vunpack.c.l.b16 %v614
    %v631 = vunpack.c.l.b16 %v615
    %v632 = vunpack.c.l.b16 %v616
    %v633 = vunpack.c.l.b16 %v617
    %v634 = vunpack.c.l.b16 %v618
    %v635 = vunpack.c.l.b16 %v619
    %v636 = vunpack.c.l.b16 %v620
    %v637 = vpack.c.b16 %v630, %v629
    %v638 = vpack.c.b16 %v632, %v631
    %v639 = vpack.c.b16 %v634, %v633
    %v640 = vpack.c.b16 %v636, %v635
    %v646 = vsel %vm173, %v611, 0
    %648 = vmatprep.subr.bf16.mxu0 0
    %649 = vmatpush1.bf16.msra.mxu0 0
    %650 = vmatprep.subr.bf16.mxu0 0
    %651 = vmatpush1.bf16.msra.mxu0 0
    %652 = vmatprep.subr.bf16.mxu0 0
    %653 = vmatpush1.bf16.msra.mxu0 0
    %654 = vmatprep.subr.bf16.mxu0 0
    %655 = vmatpush1.bf16.msra.mxu0 0
    %656 = vmatprep.subr.bf16.mxu0 0
    %657 = vmatpush1.bf16.msra.mxu0 %v640
    %658 = vmatprep.subr.bf16.mxu0 0
    %659 = vmatpush1.bf16.msra.mxu0 %v639
    %660 = vmatprep.subr.bf16.mxu0 0
    %661 = vmatpush1.bf16.msra.mxu0 %v638
    %662 = vmatprep.subr.bf16.mxu0 0
    %663 = vmatpush1.bf16.msra.mxu0 %v637
    %664 = vmatprep.subr.bf16.mxu0 0
    %665 = vmatpush2.bf16.msra.mxu0 0
    %666 = vmatprep.subr.bf16.mxu0 0
    %667 = vmatpush2.bf16.msra.mxu0 0
    %668 = vmatprep.subr.bf16.mxu0 0
    %669 = vmatpush2.bf16.msra.mxu0 0
    %670 = vmatprep.subr.bf16.mxu0 0
    %671 = vmatpush2.bf16.msra.mxu0 0
    %672 = vmatprep.subr.bf16.mxu0 0
    %673 = vmatpush2.bf16.msra.mxu0 0
    %674 = vmatprep.subr.bf16.mxu0 0
    %675 = vmatpush2.bf16.msra.mxu0 0
    %676 = vmatprep.subr.bf16.mxu0 0
    %677 = vmatpush2.bf16.msra.mxu0 0
    %678 = vmatprep.subr.bf16.mxu0 0
    %679 = vmatpush2.bf16.msra.mxu0 0
    %680 = vmatprep.mubr.bf16.mxu0 0
    %681 = vmatmul.mubr.bf16.gmra.mxu0 %v646
    %v682 = vpop.f32.mrf.mxu0
    %v683 = vadd.f32 0.0, %v682
    %v684 = vpop.f32.mrf.mxu0
    %v685 = vpop.f32.mrf.mxu0
    %v686 = vpop.f32.mrf.mxu0
    %687 = vdwg.mxu0
    %v688 = vadd.f32 %v610, %v683
    %v689 = vpack.c.bf16 %v530, %v530
    %s690 = scalar_lea.vmem [#allocation2], 192
    %v691 = vld [vmem:[%s690] sm:$0xf]
    %v692 = vld [vmem:[%s690 + $0x4] sm:$0xf]
    %v693 = vld [vmem:[%s690 + $0x8] sm:$0xf]
    %v694 = vld [vmem:[%s690 + $0xc] sm:$0xf]
    %v695 = vld [vmem:[%s690 + $0x10] sm:$0xf]
    %v696 = vld [vmem:[%s690 + $0x14] sm:$0xf]
    %v697 = vld [vmem:[%s690 + $0x18] sm:$0xf]
    %v698 = vld [vmem:[%s690 + $0x1c] sm:$0xf]
    %v707 = vunpack.c.l.b16 %v691
    %v708 = vunpack.c.l.b16 %v692
    %v709 = vunpack.c.l.b16 %v693
    %v710 = vunpack.c.l.b16 %v694
    %v711 = vunpack.c.l.b16 %v695
    %v712 = vunpack.c.l.b16 %v696
    %v713 = vunpack.c.l.b16 %v697
    %v714 = vunpack.c.l.b16 %v698
    %v715 = vpack.c.b16 %v708, %v707
    %v716 = vpack.c.b16 %v710, %v709
    %v717 = vpack.c.b16 %v712, %v711
    %v718 = vpack.c.b16 %v714, %v713
    %v724 = vsel %vm173, %v689, 0
    %726 = vmatprep.subr.bf16.mxu0 0
    %727 = vmatpush1.bf16.msra.mxu0 0
    %728 = vmatprep.subr.bf16.mxu0 0
    %729 = vmatpush1.bf16.msra.mxu0 0
    %730 = vmatprep.subr.bf16.mxu0 0
    %731 = vmatpush1.bf16.msra.mxu0 0
    %732 = vmatprep.subr.bf16.mxu0 0
    %733 = vmatpush1.bf16.msra.mxu0 0
    %734 = vmatprep.subr.bf16.mxu0 0
    %735 = vmatpush1.bf16.msra.mxu0 %v718
    %736 = vmatprep.subr.bf16.mxu0 0
    %737 = vmatpush1.bf16.msra.mxu0 %v717
    %738 = vmatprep.subr.bf16.mxu0 0
    %739 = vmatpush1.bf16.msra.mxu0 %v716
    %740 = vmatprep.subr.bf16.mxu0 0
    %741 = vmatpush1.bf16.msra.mxu0 %v715
    %742 = vmatprep.subr.bf16.mxu0 0
    %743 = vmatpush2.bf16.msra.mxu0 0
    %744 = vmatprep.subr.bf16.mxu0 0
    %745 = vmatpush2.bf16.msra.mxu0 0
    %746 = vmatprep.subr.bf16.mxu0 0
    %747 = vmatpush2.bf16.msra.mxu0 0
    %748 = vmatprep.subr.bf16.mxu0 0
    %749 = vmatpush2.bf16.msra.mxu0 0
    %750 = vmatprep.subr.bf16.mxu0 0
    %751 = vmatpush2.bf16.msra.mxu0 0
    %752 = vmatprep.subr.bf16.mxu0 0
    %753 = vmatpush2.bf16.msra.mxu0 0
    %754 = vmatprep.subr.bf16.mxu0 0
    %755 = vmatpush2.bf16.msra.mxu0 0
    %756 = vmatprep.subr.bf16.mxu0 0
    %757 = vmatpush2.bf16.msra.mxu0 0
    %758 = vmatprep.mubr.bf16.mxu0 0
    %759 = vmatmul.mubr.bf16.gmra.mxu0 %v724
    %v760 = vpop.f32.mrf.mxu0
    %v761 = vadd.f32 0.0, %v760
    %v762 = vpop.f32.mrf.mxu0
    %v763 = vpop.f32.mrf.mxu0
    %v764 = vpop.f32.mrf.mxu0
    %765 = vdwg.mxu0
    %v766 = vadd.f32 %v688, %v761
    %v767 = vld [vmem:[%s4] sm:$0x1]
    %v769 = vlaneseq
    %v770 = vshrl.u32 %v769, 7
    %v771 = vsub.s32 0, %v770
    %v772 = vrot.slane %v767, %v771
    %v774 = vadd.f32 %v766, %v772
    %775 = vst [vmem:[#allocation5] sm:$0xff] %v774
    // Predicated region
    $region26: #{tpu_custom_call.1} parent=1 // pred_check
      _
    $region27: #{tpu_custom_call.1} parent=1 // pred_check_branch
      %777 = sbr.rel (0) target = $region29
    $region28: #{tpu_custom_call.1} parent=1 // pred_region
      %s779 = ssub.s32 128, 128
      %780 = vsyncadd [#allocation4], %s779
      %s782 = sshll.u32 [#allocation5], 4
      %s783 = int_to_ptr.vmem [resolvable:$true] %s782
      %785 = dma.vmem_to_hbm [thread:$0]  %s783, 128, %s5, [#allocation4]
    $region29: #{tpu_custom_call.1} parent=1 // pred_fallthru
      _
    // Predicated region
    $region30: #{tpu_custom_call.1} parent=1 // pred_check
      _
    $region31: #{tpu_custom_call.1} parent=1 // pred_check_branch
      %787 = sbr.rel (0) target = $region33
    $region32: #{tpu_custom_call.1} parent=1 // pred_region
      %788 = dma.done [#allocation4], 128
    $region33: #{tpu_custom_call.1} parent=1 // pred_fallthru
      _
    %789 = vsyncpa [#allocation3], 1
    %790 = vsyncpa [#allocation4], 1

</llo_original>
